<compile_context>
chip_gen: v7x
topology: tpu7x:2x2x1
jax: 0.10.0
libtpu: 0.0.40
codegen_flags: <defaults>
</compile_context>

<pallas_src>
import math

import numpy as np

import jax
import jax.numpy as jnp
from jax.experimental import pallas as pl
from jax.experimental.pallas import tpu as pltpu


_YX_LANES = 8  # lane 0 = normalized y*scale, lane 1 = x*scale, rest padding


def _pe_fourier_kernel(rows_ref, const_ref, w_ref, b_ref, out_ref):
    """One row-tile of the (N, dim) fourier positional encoding.

    rows_ref : (tile_n, 8)       f32  -- lane0 = y*scale/(H+eps), lane1 = x*scale/(W+eps)
    const_ref: (8, 2*hidden)     f32  -- row0 = 1/dim_t, row1 = is_y, row2 = phase
    w_ref    : (2*hidden, dim)   bf16 -- 1x1-conv weight, pre-transposed
    b_ref    : (1, dim)          f32  -- conv bias
    out_ref  : (tile_n, dim)
    """
    y_col = rows_ref[:, 0:1]                       # (tile_n, 1)
    x_col = rows_ref[:, 1:2]                       # (tile_n, 1)
    inv_dim_t = const_ref[0:1, :]                  # (1, 2*hidden)
    is_y = const_ref[1:2, :]                       # (1, 2*hidden)
    phase = const_ref[2:3, :]                      # (1, 2*hidden)

    # select + mul + add, then a single transcendental (sin folded into cos).
    yx = jnp.where(is_y > 0.5, y_col, x_col)       # (tile_n, 2*hidden)
    emb = jnp.cos(yx * inv_dim_t + phase).astype(w_ref.dtype)

    # 1x1 conv == matmul on the MXU; bf16 operands, f32 accumulation.
    out_ref[...] = (
        jnp.dot(emb, w_ref[...], preferred_element_type=jnp.float32)
        + b_ref[...]
    ).astype(out_ref.dtype)


def _round_up(x, m):
    return ((x + m - 1) // m) * m


def _cdiv(a, b):
    return -(-a // b)


def _tensorcores_per_chip():
    # Soft heuristic: v7x exposes 2 TensorCores per chip; older gens 1.
    try:
        kind = jax.devices()[0].device_kind.lower()
    except Exception:
        return 1
    return 2 if "v7" in kind else 1


def positional_encoding_fourier(hw_shape, weight, bias, *, hidden_dim,
                                temperature=10000, flatten=True,
                                out_dtype=jnp.float32,
                                mxu_dtype=jnp.bfloat16,
                                max_rows_per_tile=2048):
    """JAX/Pallas equivalent of PositionalEncodingFourierAdpt.forward.

    weight: (dim, 2*hidden_dim) -- Conv2d(2*hidden, dim, k=1) weight squeezed
    bias  : (dim,)
    """
    H, W = int(hw_shape[0]), int(hw_shape[1])
    N = H * W
    dim = int(weight.shape[0])
    c2 = 2 * hidden_dim
    eps = 1e-6
    scale = 2.0 * math.pi

    # ---- tiling: balanced row tiles (little/no padding), megacore aware -----
    min_grid = 2 if (_tensorcores_per_chip() >= 2 and N > 512) else 1
    grid_n = max(min_grid, _cdiv(N, max_rows_per_tile))
    if grid_n <= 1:
        grid_n, tile_n = 1, N                      # full-array block; no padding
    else:
        tile_n = _round_up(_cdiv(N, grid_n), 8)
        grid_n = _cdiv(N, tile_n)
        if grid_n <= 1:
            grid_n, tile_n = 1, N
    n_pad = grid_n * tile_n

    # ---- host-side, grid-invariant column constants (single resident tile) --
    c = np.arange(c2)
    k = np.where(c < hidden_dim, c, c - hidden_dim)
    dim_t = np.power(float(temperature), 2.0 * (k // 2) / float(hidden_dim))
    const = np.zeros((8, c2), np.float32)
    const[0, :] = 1.0 / dim_t                                   # 1/dim_t
    const[1, :] = (c < hidden_dim).astype(np.float32)           # y-column mask
    const[2, :] = np.where(k % 2 == 0, -0.5 * np.pi, 0.0)       # sin -> cos phase

    # ---- host-side per-row normalized coordinates (no int div/mod in kernel)
    n_idx = np.arange(n_pad)
    h_idx = n_idx // W
    w_idx = n_idx - h_idx * W
    rows = np.zeros((n_pad, _YX_LANES), np.float32)
    rows[:, 0] = (h_idx + 1).astype(np.float32) * (scale / (float(H) + eps))
    rows[:, 1] = (w_idx + 1).astype(np.float32) * (scale / (float(W) + eps))

    w_t = jnp.asarray(weight, jnp.float32).T.astype(mxu_dtype)  # (2*hidden, dim)
    b = jnp.asarray(bias, jnp.float32).reshape(1, dim)

    out = pl.pallas_call(
        _pe_fourier_kernel,
        out_shape=jax.ShapeDtypeStruct((n_pad, dim), out_dtype),
        grid=(grid_n,),
        in_specs=[
            pl.BlockSpec((tile_n, _YX_LANES), lambda i: (i, 0)),   # row coords
            pl.BlockSpec((8, c2), lambda i: (0, 0)),               # constants
            pl.BlockSpec((c2, dim), lambda i: (0, 0)),             # weight
            pl.BlockSpec((1, dim), lambda i: (0, 0)),              # bias
        ],
        out_specs=pl.BlockSpec((tile_n, dim), lambda i: (i, 0)),
        compiler_params=pltpu.CompilerParams(
            dimension_semantics=("parallel",)),
    )(jnp.asarray(rows), jnp.asarray(const), w_t, b)

    if n_pad != N:
        out = out[:N]                               # only when padding exists
    if flatten:
        return out[None]                            # (1, H*W, dim)
    # TODO(synk): if the channels-first path is hot, emit (dim, tile_n) blocks
    # directly from the kernel instead of this wrapper transpose.
    return out.T.reshape(1, dim, H, W)              # (1, dim, H, W)


def _reference(hw_shape, weight, bias, hidden_dim, temperature=10000,
               flatten=True):
    """Pure-JAX transcription of the PyTorch forward (for verification)."""
    H, W = hw_shape
    eps = 1e-6
    scale = 2.0 * math.pi
    y = jnp.cumsum(jnp.ones((H, W), jnp.float32), axis=0)
    x = jnp.cumsum(jnp.ones((H, W), jnp.float32), axis=1)
    y = y / (y[-1:, :] + eps) * scale
    x = x / (x[:, -1:] + eps) * scale
    dim_t = jnp.arange(hidden_dim, dtype=jnp.float32)
    dim_t = temperature ** (2 * (dim_t // 2) / hidden_dim)
    pos_x = x[:, :, None] / dim_t
    pos_y = y[:, :, None] / dim_t
    pos_x = jnp.stack((jnp.sin(pos_x[:, :, 0::2]), jnp.cos(pos_x[:, :, 1::2])),
                      axis=3).reshape(H, W, -1)
    pos_y = jnp.stack((jnp.sin(pos_y[:, :, 0::2]), jnp.cos(pos_y[:, :, 1::2])),
                      axis=3).reshape(H, W, -1)
    pos = jnp.concatenate((pos_y, pos_x), axis=2)          # (H, W, 2*hidden)
    out = pos.reshape(H * W, -1) @ weight.T + bias          # (N, dim)
    if flatten:
        return out[None]
    return out.T.reshape(1, -1, H, W)


if __name__ == "__main__":
    # Small, deterministic setup consistent with the module's __init__.
    hidden_dim = 16
    dim = 128

    key = jax.random.PRNGKey(0)
    kw, kb = jax.random.split(key)
    # Conv2d(2*hidden, dim, kernel_size=1) weight (dim, 2*hidden, 1, 1) -> squeezed.
    weight = jax.random.normal(kw, (dim, 2 * hidden_dim), jnp.float32) * 0.02
    bias = jax.random.normal(kb, (dim,), jnp.float32) * 0.02

    # Exercise: aligned single-tile, non-aligned single-tile (full-array block),
    # balanced multi-tile (zero padding), padded multi-tile (slice path), and
    # the channels-first output path.
    cases = [
        ((8, 16), 2048, True),
        ((7, 9), 2048, True),
        ((40, 40), 512, True),
        ((37, 11), 128, True),
        ((8, 16), 2048, False),
    ]
    for hw_shape, max_tile, flatten in cases:
        out = positional_encoding_fourier(
            hw_shape, weight, bias, hidden_dim=hidden_dim, flatten=flatten,
            max_rows_per_tile=max_tile)
        out = jax.block_until_ready(out)
        ref = _reference(hw_shape, weight, bias, hidden_dim, flatten=flatten)
        assert out.shape == ref.shape, (out.shape, ref.shape)
        # bf16 MXU operands -> relaxed tolerance (f32 accumulation).
        assert jnp.allclose(out, ref, atol=2e-2, rtol=2e-2), \
            f"mismatch vs reference for hw_shape={hw_shape}, flatten={flatten}"

    print("KERNEL_OK")
</pallas_src>

<mosaic_0001>
module attributes {stable_mosaic.version = 11 : i64} {
  func.func @_pe_fourier_kernel(%arg0: i32, %arg1: memref<128x8xf32, #tpu.memory_space<vmem>>, %arg2: memref<8x32xf32, #tpu.memory_space<vmem>>, %arg3: memref<32x128xbf16, #tpu.memory_space<vmem>>, %arg4: memref<1x128xf32, #tpu.memory_space<vmem>>, %arg5: memref<128x128xf32, #tpu.memory_space<vmem>>) attributes {dimension_semantics = [#tpu.dimension_semantics<parallel>], iteration_bounds = array<i64: 1>, scalar_prefetch = 0 : i64, scratch_operands = 0 : i64, tpu.core_type = #tpu.core_type<tc>, window_params = [{transform_indices = @transform_0, window_bounds = array<i64: 128, 8>}, {pipeline_mode = #tpu.pipeline_mode<synchronous>, transform_indices = @transform_1, window_bounds = array<i64: 8, 32>}, {pipeline_mode = #tpu.pipeline_mode<synchronous>, transform_indices = @transform_2, window_bounds = array<i64: 32, 128>}, {pipeline_mode = #tpu.pipeline_mode<synchronous>, transform_indices = @transform_3, window_bounds = array<i64: 1, 128>}, {transform_indices = @transform_4, window_bounds = array<i64: 128, 128>}]} {
    %c0 = arith.constant 0 : index
    %c0_0 = arith.constant 0 : index
    %0 = vector.load %arg1[%c0, %c0_0] : memref<128x8xf32, #tpu.memory_space<vmem>>, vector<128x1xf32>
    %c0_1 = arith.constant 0 : index
    %c1 = arith.constant 1 : index
    %1 = vector.load %arg1[%c0_1, %c1] : memref<128x8xf32, #tpu.memory_space<vmem>>, vector<128x1xf32>
    %c0_2 = arith.constant 0 : index
    %c0_3 = arith.constant 0 : index
    %2 = vector.load %arg2[%c0_2, %c0_3] : memref<8x32xf32, #tpu.memory_space<vmem>>, vector<1x32xf32>
    %c1_4 = arith.constant 1 : index
    %c0_5 = arith.constant 0 : index
    %3 = vector.load %arg2[%c1_4, %c0_5] : memref<8x32xf32, #tpu.memory_space<vmem>>, vector<1x32xf32>
    %c2 = arith.constant 2 : index
    %c0_6 = arith.constant 0 : index
    %4 = vector.load %arg2[%c2, %c0_6] : memref<8x32xf32, #tpu.memory_space<vmem>>, vector<1x32xf32>
    %cst = arith.constant 5.000000e-01 : f32
    %5 = vector.broadcast %cst : f32 to vector<1x32xf32>
    %6 = arith.cmpf ogt, %3, %5 : vector<1x32xf32>
    %7 = vector.shape_cast %6 : vector<1x32xi1> to vector<1x32xi1>
    %8 = vector.broadcast %7 : vector<1x32xi1> to vector<128x32xi1>
    %9 = vector.shape_cast %0 : vector<128x1xf32> to vector<128x1xf32>
    %10 = vector.broadcast %9 : vector<128x1xf32> to vector<128x32xf32>
    %11 = vector.shape_cast %1 : vector<128x1xf32> to vector<128x1xf32>
    %12 = vector.broadcast %11 : vector<128x1xf32> to vector<128x32xf32>
    %13 = arith.select %8, %10, %12 : vector<128x32xi1>, vector<128x32xf32>
    %14 = vector.broadcast %2 : vector<1x32xf32> to vector<128x32xf32>
    %15 = arith.mulf %13, %14 : vector<128x32xf32>
    %16 = vector.broadcast %4 : vector<1x32xf32> to vector<128x32xf32>
    %17 = arith.addf %15, %16 : vector<128x32xf32>
    %18 = math.cos %17 : vector<128x32xf32>
    %19 = arith.truncf %18 : vector<128x32xf32> to vector<128x32xbf16>
    %c0_7 = arith.constant 0 : index
    %c0_8 = arith.constant 0 : index
    %20 = vector.load %arg3[%c0_7, %c0_8] : memref<32x128xbf16, #tpu.memory_space<vmem>>, vector<32x128xbf16>
    %cst_9 = arith.constant dense<0.000000e+00> : vector<128x128xf32>
    %21 = tpu.matmul %19, %20, %cst_9 {dimension_numbers = #tpu.dot_dimension_numbers<[1], [0], [0], [1], [0, 0, 1, 1], [], []>} : vector<128x32xbf16>, vector<32x128xbf16>, vector<128x128xf32> -> vector<128x128xf32>
    %c0_10 = arith.constant 0 : index
    %c0_11 = arith.constant 0 : index
    %22 = vector.load %arg4[%c0_10, %c0_11] : memref<1x128xf32, #tpu.memory_space<vmem>>, vector<1x128xf32>
    %23 = vector.broadcast %22 : vector<1x128xf32> to vector<128x128xf32>
    %24 = arith.addf %21, %23 : vector<128x128xf32>
    %c0_12 = arith.constant 0 : index
    %c0_13 = arith.constant 0 : index
    %25 = vector.load %arg5[%c0_12, %c0_13] : memref<128x128xf32, #tpu.memory_space<vmem>>, vector<128x128xf32>
    tpu.vector_store %arg5[%c0_12, %c0_13], %24 {strides = array<i32>} : memref<128x128xf32, #tpu.memory_space<vmem>>, vector<128x128xf32>,
    return
  }
  func.func @transform_0(%arg0: i32) -> (i32, i32) {
    %c0_i32 = arith.constant 0 : i32
    %c0_i32_0 = arith.constant 0 : i32
    return %arg0, %c0_i32 : i32, i32
  }
  func.func @transform_1(%arg0: i32) -> (i32, i32) {
    %c0_i32 = arith.constant 0 : i32
    %c0_i32_0 = arith.constant 0 : i32
    %c0_i32_1 = arith.constant 0 : i32
    return %c0_i32, %c0_i32_0 : i32, i32
  }
  func.func @transform_2(%arg0: i32) -> (i32, i32) {
    %c0_i32 = arith.constant 0 : i32
    %c0_i32_0 = arith.constant 0 : i32
    %c0_i32_1 = arith.constant 0 : i32
    return %c0_i32, %c0_i32_0 : i32, i32
  }
  func.func @transform_3(%arg0: i32) -> (i32, i32) {
    %c0_i32 = arith.constant 0 : i32
    %c0_i32_0 = arith.constant 0 : i32
    %c0_i32_1 = arith.constant 0 : i32
    return %c0_i32, %c0_i32_0 : i32, i32
  }
  func.func @transform_4(%arg0: i32) -> (i32, i32) {
    %c0_i32 = arith.constant 0 : i32
    %c0_i32_0 = arith.constant 0 : i32
    return %arg0, %c0_i32 : i32, i32
  }
}

</mosaic_0001>

<llo_original>
// kernel: tpu_custom_call.1
$region0: #{tpu_custom_call.1}
  #allocation0 [shape = 'u32[]', space=smem, size = 0x4, offset = 0x4, fixed_abs, tag = 'smem constant byte address 0x4 - core index']
  #allocation1 [shape = 'u32[144,128]{1,0:T(1,128)}', space=vmem, size = 0x12000, scoped, tag = 'internal scratch']
  %s0 = inlined_call_operand.vmem [shape: f32[128,8], index: 0, kind: input, shape index: {}]
  %s1 = inlined_call_operand.vmem [shape: f32[8,32], index: 1, kind: input, shape index: {}]
  %s2 = inlined_call_operand.vmem [shape: bf16[32,128], index: 2, kind: input, shape index: {}]
  %s3 = inlined_call_operand.vmem [shape: f32[1,128], index: 3, kind: input, shape index: {}]
  %s4 = inlined_call_operand.hbm [shape: f32[128,128], index: 4, kind: output, shape index: {}]
  %s5 = sld [smem:[#allocation0]]
  $region26: #{tpu_custom_call.1} parent=0
    _
  %s7 = ssub.s32 1, %s5
  %s8 = scalar_select 0, %s7, %s5
  $region1: #{tpu_custom_call.1} parent=0
    #allocation2 [shape = 'u8[65536]{0}', space=vmem, size = 0x10000, scoped, tag = 'output window, operand 0, single buffered']
    #allocation3 [shape = 's32[1]{0}', space=sflag, size = 0x4, scoped, tag = 'scoped memory for tpu_custom_call.1']
    %9 = vsyncpa [#allocation3], 0
    // Predicated region
    $region2: #{tpu_custom_call.1} parent=1 // pred_check
      _
    $region3: #{tpu_custom_call.1} parent=1 // pred_check_branch
      %11 = sbr.rel (0) target = $region5
    $region4: #{tpu_custom_call.1} parent=1 // pred_region
      _
    $region5: #{tpu_custom_call.1} parent=1 // pred_fallthru
      _
    // Predicated region
    $region6: #{tpu_custom_call.1} parent=1 // pred_check
      _
    $region7: #{tpu_custom_call.1} parent=1 // pred_check_branch
      %13 = sbr.rel (0) target = $region9
    $region8: #{tpu_custom_call.1} parent=1 // pred_region
      _
    $region9: #{tpu_custom_call.1} parent=1 // pred_fallthru
      _
    // Predicated region
    $region10: #{tpu_custom_call.1} parent=1 // pred_check
      _
    $region11: #{tpu_custom_call.1} parent=1 // pred_check_branch
      %15 = sbr.rel (0) target = $region13
    $region12: #{tpu_custom_call.1} parent=1 // pred_region
      _
    $region13: #{tpu_custom_call.1} parent=1 // pred_fallthru
      _
    // Predicated region
    $region14: #{tpu_custom_call.1} parent=1 // pred_check
      _
    $region15: #{tpu_custom_call.1} parent=1 // pred_check_branch
      %17 = sbr.rel (0) target = $region17
    $region16: #{tpu_custom_call.1} parent=1 // pred_region
      _
    $region17: #{tpu_custom_call.1} parent=1 // pred_fallthru
      _
    %v19 = vld [vmem:[%s0] sm:$0xff]
    %v20 = vld [vmem:[%s0 + $0x8] sm:$0xff]
    %v21 = vld [vmem:[%s0 + $0x10] sm:$0xff]
    %v22 = vld [vmem:[%s0 + $0x18] sm:$0xff]
    %v23 = vld [vmem:[%s0 + $0x20] sm:$0xff]
    %v24 = vld [vmem:[%s0 + $0x28] sm:$0xff]
    %v25 = vld [vmem:[%s0 + $0x30] sm:$0xff]
    %v26 = vld [vmem:[%s0 + $0x38] sm:$0xff]
    %v27 = vld [vmem:[%s0 + $0x40] sm:$0xff]
    %v28 = vld [vmem:[%s0 + $0x48] sm:$0xff]
    %v29 = vld [vmem:[%s0 + $0x50] sm:$0xff]
    %v30 = vld [vmem:[%s0 + $0x58] sm:$0xff]
    %v31 = vld [vmem:[%s0 + $0x60] sm:$0xff]
    %v32 = vld [vmem:[%s0 + $0x68] sm:$0xff]
    %v33 = vld [vmem:[%s0 + $0x70] sm:$0xff]
    %v34 = vld [vmem:[%s0 + $0x78] sm:$0xff]
    %v35 = vld [vmem:[%s1] sm:$0x1]
    %v36 = vld [vmem:[%s1 + $0x1] sm:$0x1]
    %v37 = vld [vmem:[%s1 + $0x2] sm:$0x1]
    %vm38 = vcmp.gt.f32.partialorder %v36, 0.5
    %v39 = vsel %vm38, 1, 0
    %v40 = vlaneseq
    %v41 = vshrl.u32 %v40, 7
    %v42 = vsub.s32 0, %v41
    %v43 = vrot.slane %v39, %v42
    %vm44 = vcmp.eq.s32.totalorder %v43, 1
    %46 = vset.pattern.permute.xlu0 0
    %47 = vperm.xlu0 %46, %v19
    %v48 = vpop.permute.xlu0 %47
    %51 = vset.pattern.permute.xlu0 0
    %52 = vperm.xlu0 %51, %v20
    %v53 = vpop.permute.xlu0 %52
    %56 = vset.pattern.permute.xlu0 0
    %57 = vperm.xlu0 %56, %v21
    %v58 = vpop.permute.xlu0 %57
    %61 = vset.pattern.permute.xlu0 0
    %62 = vperm.xlu0 %61, %v22
    %v63 = vpop.permute.xlu0 %62
    %66 = vset.pattern.permute.xlu0 0
    %67 = vperm.xlu0 %66, %v23
    %v68 = vpop.permute.xlu0 %67
    %71 = vset.pattern.permute.xlu0 0
    %72 = vperm.xlu0 %71, %v24
    %v73 = vpop.permute.xlu0 %72
    %76 = vset.pattern.permute.xlu0 0
    %77 = vperm.xlu0 %76, %v25
    %v78 = vpop.permute.xlu0 %77
    %81 = vset.pattern.permute.xlu0 0
    %82 = vperm.xlu0 %81, %v26
    %v83 = vpop.permute.xlu0 %82
    %86 = vset.pattern.permute.xlu0 0
    %87 = vperm.xlu0 %86, %v27
    %v88 = vpop.permute.xlu0 %87
    %91 = vset.pattern.permute.xlu0 0
    %92 = vperm.xlu0 %91, %v28
    %v93 = vpop.permute.xlu0 %92
    %96 = vset.pattern.permute.xlu0 0
    %97 = vperm.xlu0 %96, %v29
    %v98 = vpop.permute.xlu0 %97
    %101 = vset.pattern.permute.xlu0 0
    %102 = vperm.xlu0 %101, %v30
    %v103 = vpop.permute.xlu0 %102
    %106 = vset.pattern.permute.xlu0 0
    %107 = vperm.xlu0 %106, %v31
    %v108 = vpop.permute.xlu0 %107
    %111 = vset.pattern.permute.xlu0 0
    %112 = vperm.xlu0 %111, %v32
    %v113 = vpop.permute.xlu0 %112
    %116 = vset.pattern.permute.xlu0 0
    %117 = vperm.xlu0 %116, %v33
    %v118 = vpop.permute.xlu0 %117
    %121 = vset.pattern.permute.xlu0 0
    %122 = vperm.xlu0 %121, %v34
    %v123 = vpop.permute.xlu0 %122
    %125 = vset.pattern.permute.xlu0 1
    %126 = vperm.xlu0 %125, %v19
    %v127 = vpop.permute.xlu0 %126
    %129 = vset.pattern.permute.xlu0 1
    %130 = vperm.xlu0 %129, %v20
    %v131 = vpop.permute.xlu0 %130
    %133 = vset.pattern.permute.xlu0 1
    %134 = vperm.xlu0 %133, %v21
    %v135 = vpop.permute.xlu0 %134
    %137 = vset.pattern.permute.xlu0 1
    %138 = vperm.xlu0 %137, %v22
    %v139 = vpop.permute.xlu0 %138
    %141 = vset.pattern.permute.xlu0 1
    %142 = vperm.xlu0 %141, %v23
    %v143 = vpop.permute.xlu0 %142
    %145 = vset.pattern.permute.xlu0 1
    %146 = vperm.xlu0 %145, %v24
    %v147 = vpop.permute.xlu0 %146
    %149 = vset.pattern.permute.xlu0 1
    %150 = vperm.xlu0 %149, %v25
    %v151 = vpop.permute.xlu0 %150
    %153 = vset.pattern.permute.xlu0 1
    %154 = vperm.xlu0 %153, %v26
    %v155 = vpop.permute.xlu0 %154
    %157 = vset.pattern.permute.xlu0 1
    %158 = vperm.xlu0 %157, %v27
    %v159 = vpop.permute.xlu0 %158
    %161 = vset.pattern.permute.xlu0 1
    %162 = vperm.xlu0 %161, %v28
    %v163 = vpop.permute.xlu0 %162
    %165 = vset.pattern.permute.xlu0 1
    %166 = vperm.xlu0 %165, %v29
    %v167 = vpop.permute.xlu0 %166
    %169 = vset.pattern.permute.xlu0 1
    %170 = vperm.xlu0 %169, %v30
    %v171 = vpop.permute.xlu0 %170
    %173 = vset.pattern.permute.xlu0 1
    %174 = vperm.xlu0 %173, %v31
    %v175 = vpop.permute.xlu0 %174
    %177 = vset.pattern.permute.xlu0 1
    %178 = vperm.xlu0 %177, %v32
    %v179 = vpop.permute.xlu0 %178
    %181 = vset.pattern.permute.xlu0 1
    %182 = vperm.xlu0 %181, %v33
    %v183 = vpop.permute.xlu0 %182
    %185 = vset.pattern.permute.xlu0 1
    %186 = vperm.xlu0 %185, %v34
    %v187 = vpop.permute.xlu0 %186
    %v189 = vsel %vm44, %v48, %v127
    %v190 = vsel %vm44, %v53, %v131
    %v191 = vsel %vm44, %v58, %v135
    %v192 = vsel %vm44, %v63, %v139
    %v193 = vsel %vm44, %v68, %v143
    %v194 = vsel %vm44, %v73, %v147
    %v195 = vsel %vm44, %v78, %v151
    %v196 = vsel %vm44, %v83, %v155
    %v197 = vsel %vm44, %v88, %v159
    %v198 = vsel %vm44, %v93, %v163
    %v199 = vsel %vm44, %v98, %v167
    %v200 = vsel %vm44, %v103, %v171
    %v201 = vsel %vm44, %v108, %v175
    %v202 = vsel %vm44, %v113, %v179
    %v203 = vsel %vm44, %v118, %v183
    %v204 = vsel %vm44, %v123, %v187
    %v205 = vlaneseq
    %v206 = vshrl.u32 %v205, 7
    %v207 = vsub.s32 0, %v206
    %v208 = vrot.slane %v35, %v207
    %v209 = vmul.f32 %v189, %v208
    %v210 = vmul.f32 %v190, %v208
    %v211 = vmul.f32 %v191, %v208
    %v212 = vmul.f32 %v192, %v208
    %v213 = vmul.f32 %v193, %v208
    %v214 = vmul.f32 %v194, %v208
    %v215 = vmul.f32 %v195, %v208
    %v216 = vmul.f32 %v196, %v208
    %v217 = vmul.f32 %v197, %v208
    %v218 = vmul.f32 %v198, %v208
    %v219 = vmul.f32 %v199, %v208
    %v220 = vmul.f32 %v200, %v208
    %v221 = vmul.f32 %v201, %v208
    %v222 = vmul.f32 %v202, %v208
    %v223 = vmul.f32 %v203, %v208
    %v224 = vmul.f32 %v204, %v208
    %v225 = vlaneseq
    %v226 = vshrl.u32 %v225, 7
    %v227 = vsub.s32 0, %v226
    %v228 = vrot.slane %v37, %v227
    %v229 = vadd.f32 %v209, %v228
    %v230 = vadd.f32 %v210, %v228
    %v231 = vadd.f32 %v211, %v228
    %v232 = vadd.f32 %v212, %v228
    %v233 = vadd.f32 %v213, %v228
    %v234 = vadd.f32 %v214, %v228
    %v235 = vadd.f32 %v215, %v228
    %v236 = vadd.f32 %v216, %v228
    %v237 = vadd.f32 %v217, %v228
    %v238 = vadd.f32 %v218, %v228
    %v239 = vadd.f32 %v219, %v228
    %v240 = vadd.f32 %v220, %v228
    %v241 = vadd.f32 %v221, %v228
    %v242 = vadd.f32 %v222, %v228
    %v243 = vadd.f32 %v223, %v228
    %v244 = vadd.f32 %v224, %v228
    %v245 = vand.u32 2147483647, %v229
    %vm246 = vcmp.le.f32.partialorder %v245, 0.7853982
    %vm247 = vcmp.lt.s32.totalorder %v229, 0
    %v248 = vand.u32 %v229, 2139095040
    %v249 = vshrl.u32 %v248, 23
    %v250 = vsub.s32 %v249, 127
    %v251 = vand.u32 2147483647, %v229
    %v252 = vand.u32 %v251, 8388607
    %v253 = vor.u32 %v252, 8388608
    %v254 = vsub.s32 0, %v253
    %v255 = vadd.s32 %v250, 1
    %vm256 = vcmp.gt.s32.totalorder %v255, 0
    %v257 = vsel %vm256, %v255, 0
    %v258 = vshrl.u32 %v257, 5
    %v259 = vand.u32 %v257, 31
    %v260 = vsub.s32 32, %v259
    %v261 = vshrl.u32 683565275, %v260
    %v262 = vshll.u32 683565275, %v259
    %v263 = vshrl.u32 2475754826, %v260
    %v264 = vor.u32 %v262, %v263
    %v265 = vshll.u32 2475754826, %v259
    %v266 = vshrl.u32 2131351028, %v260
    %v267 = vor.u32 %v265, %v266
    %v268 = vshll.u32 2131351028, %v259
    %v269 = vshrl.u32 2102212464, %v260
    %v270 = vor.u32 %v268, %v269
    %v271 = vshll.u32 2102212464, %v259
    %v272 = vshrl.u32 920167782, %v260
    %v273 = vor.u32 %v271, %v272
    %v274 = vshll.u32 920167782, %v259
    %v275 = vshrl.u32 1326507024, %v260
    %v276 = vor.u32 %v274, %v275
    %vm277 = vcmp.lt.s32.totalorder %v258, 1
    %vm278 = vcmp.lt.s32.totalorder %v258, 2
    %vm279 = vcmp.lt.s32.totalorder %v258, 3
    %vm280 = vcmp.lt.s32.totalorder %v258, 4
    %v281 = vsel %vm277, %v261, %v264
    %v282 = vsel %vm280, %v270, 2102212464
    %v283 = vsel %vm279, %v267, %v282
    %v284 = vsel %vm278, %v281, %v283
    %v285 = vsel %vm277, %v264, %v267
    %v286 = vsel %vm280, %v273, 920167782
    %v287 = vsel %vm279, %v270, %v286
    %v288 = vsel %vm278, %v285, %v287
    %v289 = vsel %vm277, %v267, %v270
    %v290 = vsel %vm280, %v276, 1326507024
    %v291 = vsel %vm279, %v273, %v290
    %v292 = vsel %vm278, %v289, %v291
    %v293 = vshll.u32 %v253, 8
    %v294 = vmul.u32.u64.compose %v293, %v292
    %v295 = vextract.low.u32 %v294
    %v296 = vextract.high.u32 %v294
    %v297 = vmul.u32.u64.compose %v293, %v288
    %v298 = vextract.low.u32 %v297
    %v299 = vextract.high.u32 %v297
    %v300 = vmul.u32 %v293, %v284
    %v301 = vadd.s32 %v296, %v298
    %vm302 = vc.u32 %v296, %v298
    %v303 = vadd.s32 %v299, 1
    %v304 = vsel %vm302, %v303, %v299
    %v305 = vadd.s32 %v300, %v304
    %v306 = vadd.s32 %v305, 536870912
    %v307 = vshrl.u32 %v306, 30
    %v308 = vshll.u32 %v307, 30
    %v309 = vsub.s32 %v305, %v308
    %vm310 = vcmp.lt.s32.totalorder %v309, 0
    %v311 = vsub.s32 0, %v309
    %v312 = vsel %vm310, %v311, %v309
    %v313 = vclz %v312
    %v314 = vsub.s32 %v313, 2
    %vm315 = vcmp.gt.s32.totalorder 0, %v314
    %v316 = vsel %vm315, 0, %v314
    %v317 = vsub.s32 32, %v316
    %v318 = vshll.u32 %v309, %v316
    %v319 = vshrl.u32 %v301, %v317
    %v320 = vor.u32 %v318, %v319
    %v321 = vsub.s32 4294967266, %v316
    %v322 = vadd.s32 %v321, 127
    %v323 = vshll.u32 %v322, 23
    %v324 = vor.u32 4788187, %v323
    %v325 = vand.u32 2147483647, %v324
    %v327 = vcvt.s32.f32 %v320
    %v328 = vmul.f32 %v327, %v325
    %v329 = vxor.u32 %v328, 2147483648
    %v330 = vsel %vm247, %v329, %v328
    %v331 = vsub.s32 4, %v307
    %v332 = vsel %vm247, %v331, %v307
    %v333 = vsel %vm246, %v229, %v330
    %v334 = vsel %vm246, 0, %v332
    %v335 = vcosq.f32.pop %v333
    %v336 = vsinq.f32.pop %v333
    %vm337 = vweird.f32 %v229
    %v338 = vand.u32 %v334, 3
    %vm339 = vcmp.lt.s32.totalorder %v338, 2
    %vm340 = vcmp.eq.s32.totalorder %v338, 0
    %v341 = vxor.u32 %v336, 2147483648
    %v342 = vsel %vm340, %v335, %v341
    %vm343 = vcmp.eq.s32.totalorder %v338, 2
    %v344 = vxor.u32 %v335, 2147483648
    %v345 = vsel %vm343, %v344, %v336
    %v346 = vsel %vm339, %v342, %v345
    %v347 = vsel %vm337, nan, %v346
    %v348 = vand.u32 2147483647, %v230
    %vm349 = vcmp.le.f32.partialorder %v348, 0.7853982
    %vm350 = vcmp.lt.s32.totalorder %v230, 0
    %v351 = vand.u32 %v230, 2139095040
    %v352 = vshrl.u32 %v351, 23
    %v353 = vsub.s32 %v352, 127
    %v354 = vand.u32 2147483647, %v230
    %v355 = vand.u32 %v354, 8388607
    %v356 = vor.u32 %v355, 8388608
    %v357 = vsub.s32 0, %v356
    %v358 = vadd.s32 %v353, 1
    %vm359 = vcmp.gt.s32.totalorder %v358, 0
    %v360 = vsel %vm359, %v358, 0
    %v361 = vshrl.u32 %v360, 5
    %v362 = vand.u32 %v360, 31
    %v363 = vsub.s32 32, %v362
    %v364 = vshrl.u32 683565275, %v363
    %v365 = vshll.u32 683565275, %v362
    %v366 = vshrl.u32 2475754826, %v363
    %v367 = vor.u32 %v365, %v366
    %v368 = vshll.u32 2475754826, %v362
    %v369 = vshrl.u32 2131351028, %v363
    %v370 = vor.u32 %v368, %v369
    %v371 = vshll.u32 2131351028, %v362
    %v372 = vshrl.u32 2102212464, %v363
    %v373 = vor.u32 %v371, %v372
    %v374 = vshll.u32 2102212464, %v362
    %v375 = vshrl.u32 920167782, %v363
    %v376 = vor.u32 %v374, %v375
    %v377 = vshll.u32 920167782, %v362
    %v378 = vshrl.u32 1326507024, %v363
    %v379 = vor.u32 %v377, %v378
    %vm380 = vcmp.lt.s32.totalorder %v361, 1
    %vm381 = vcmp.lt.s32.totalorder %v361, 2
    %vm382 = vcmp.lt.s32.totalorder %v361, 3
    %vm383 = vcmp.lt.s32.totalorder %v361, 4
    %v384 = vsel %vm380, %v364, %v367
    %v385 = vsel %vm383, %v373, 2102212464
    %v386 = vsel %vm382, %v370, %v385
    %v387 = vsel %vm381, %v384, %v386
    %v388 = vsel %vm380, %v367, %v370
    %v389 = vsel %vm383, %v376, 920167782
    %v390 = vsel %vm382, %v373, %v389
    %v391 = vsel %vm381, %v388, %v390
    %v392 = vsel %vm380, %v370, %v373
    %v393 = vsel %vm383, %v379, 1326507024
    %v394 = vsel %vm382, %v376, %v393
    %v395 = vsel %vm381, %v392, %v394
    %v396 = vshll.u32 %v356, 8
    %v397 = vmul.u32.u64.compose %v396, %v395
    %v398 = vextract.low.u32 %v397
    %v399 = vextract.high.u32 %v397
    %v400 = vmul.u32.u64.compose %v396, %v391
    %v401 = vextract.low.u32 %v400
    %v402 = vextract.high.u32 %v400
    %v403 = vmul.u32 %v396, %v387
    %v404 = vadd.s32 %v399, %v401
    %vm405 = vc.u32 %v399, %v401
    %v406 = vadd.s32 %v402, 1
    %v407 = vsel %vm405, %v406, %v402
    %v408 = vadd.s32 %v403, %v407
    %v409 = vadd.s32 %v408, 536870912
    %v410 = vshrl.u32 %v409, 30
    %v411 = vshll.u32 %v410, 30
    %v412 = vsub.s32 %v408, %v411
    %vm413 = vcmp.lt.s32.totalorder %v412, 0
    %v414 = vsub.s32 0, %v412
    %v415 = vsel %vm413, %v414, %v412
    %v416 = vclz %v415
    %v417 = vsub.s32 %v416, 2
    %vm418 = vcmp.gt.s32.totalorder 0, %v417
    %v419 = vsel %vm418, 0, %v417
    %v420 = vsub.s32 32, %v419
    %v421 = vshll.u32 %v412, %v419
    %v422 = vshrl.u32 %v404, %v420
    %v423 = vor.u32 %v421, %v422
    %v424 = vsub.s32 4294967266, %v419
    %v425 = vadd.s32 %v424, 127
    %v426 = vshll.u32 %v425, 23
    %v427 = vor.u32 4788187, %v426
    %v428 = vand.u32 2147483647, %v427
    %v430 = vcvt.s32.f32 %v423
    %v431 = vmul.f32 %v430, %v428
    %v432 = vxor.u32 %v431, 2147483648
    %v433 = vsel %vm350, %v432, %v431
    %v434 = vsub.s32 4, %v410
    %v435 = vsel %vm350, %v434, %v410
    %v436 = vsel %vm349, %v230, %v433
    %v437 = vsel %vm349, 0, %v435
    %v438 = vcosq.f32.pop %v436
    %v439 = vsinq.f32.pop %v436
    %vm440 = vweird.f32 %v230
    %v441 = vand.u32 %v437, 3
    %vm442 = vcmp.lt.s32.totalorder %v441, 2
    %vm443 = vcmp.eq.s32.totalorder %v441, 0
    %v444 = vxor.u32 %v439, 2147483648
    %v445 = vsel %vm443, %v438, %v444
    %vm446 = vcmp.eq.s32.totalorder %v441, 2
    %v447 = vxor.u32 %v438, 2147483648
    %v448 = vsel %vm446, %v447, %v439
    %v449 = vsel %vm442, %v445, %v448
    %v450 = vsel %vm440, nan, %v449
    %v451 = vand.u32 2147483647, %v231
    %vm452 = vcmp.le.f32.partialorder %v451, 0.7853982
    %vm453 = vcmp.lt.s32.totalorder %v231, 0
    %v454 = vand.u32 %v231, 2139095040
    %v455 = vshrl.u32 %v454, 23
    %v456 = vsub.s32 %v455, 127
    %v457 = vand.u32 2147483647, %v231
    %v458 = vand.u32 %v457, 8388607
    %v459 = vor.u32 %v458, 8388608
    %v460 = vsub.s32 0, %v459
    %v461 = vadd.s32 %v456, 1
    %vm462 = vcmp.gt.s32.totalorder %v461, 0
    %v463 = vsel %vm462, %v461, 0
    %v464 = vshrl.u32 %v463, 5
    %v465 = vand.u32 %v463, 31
    %v466 = vsub.s32 32, %v465
    %v467 = vshrl.u32 683565275, %v466
    %v468 = vshll.u32 683565275, %v465
    %v469 = vshrl.u32 2475754826, %v466
    %v470 = vor.u32 %v468, %v469
    %v471 = vshll.u32 2475754826, %v465
    %v472 = vshrl.u32 2131351028, %v466
    %v473 = vor.u32 %v471, %v472
    %v474 = vshll.u32 2131351028, %v465
    %v475 = vshrl.u32 2102212464, %v466
    %v476 = vor.u32 %v474, %v475
    %v477 = vshll.u32 2102212464, %v465
    %v478 = vshrl.u32 920167782, %v466
    %v479 = vor.u32 %v477, %v478
    %v480 = vshll.u32 920167782, %v465
    %v481 = vshrl.u32 1326507024, %v466
    %v482 = vor.u32 %v480, %v481
    %vm483 = vcmp.lt.s32.totalorder %v464, 1
    %vm484 = vcmp.lt.s32.totalorder %v464, 2
    %vm485 = vcmp.lt.s32.totalorder %v464, 3
    %vm486 = vcmp.lt.s32.totalorder %v464, 4
    %v487 = vsel %vm483, %v467, %v470
    %v488 = vsel %vm486, %v476, 2102212464
    %v489 = vsel %vm485, %v473, %v488
    %v490 = vsel %vm484, %v487, %v489
    %v491 = vsel %vm483, %v470, %v473
    %v492 = vsel %vm486, %v479, 920167782
    %v493 = vsel %vm485, %v476, %v492
    %v494 = vsel %vm484, %v491, %v493
    %v495 = vsel %vm483, %v473, %v476
    %v496 = vsel %vm486, %v482, 1326507024
    %v497 = vsel %vm485, %v479, %v496
    %v498 = vsel %vm484, %v495, %v497
    %v499 = vshll.u32 %v459, 8
    %v500 = vmul.u32.u64.compose %v499, %v498
    %v501 = vextract.low.u32 %v500
    %v502 = vextract.high.u32 %v500
    %v503 = vmul.u32.u64.compose %v499, %v494
    %v504 = vextract.low.u32 %v503
    %v505 = vextract.high.u32 %v503
    %v506 = vmul.u32 %v499, %v490
    %v507 = vadd.s32 %v502, %v504
    %vm508 = vc.u32 %v502, %v504
    %v509 = vadd.s32 %v505, 1
    %v510 = vsel %vm508, %v509, %v505
    %v511 = vadd.s32 %v506, %v510
    %v512 = vadd.s32 %v511, 536870912
    %v513 = vshrl.u32 %v512, 30
    %v514 = vshll.u32 %v513, 30
    %v515 = vsub.s32 %v511, %v514
    %vm516 = vcmp.lt.s32.totalorder %v515, 0
    %v517 = vsub.s32 0, %v515
    %v518 = vsel %vm516, %v517, %v515
    %v519 = vclz %v518
    %v520 = vsub.s32 %v519, 2
    %vm521 = vcmp.gt.s32.totalorder 0, %v520
    %v522 = vsel %vm521, 0, %v520
    %v523 = vsub.s32 32, %v522
    %v524 = vshll.u32 %v515, %v522
    %v525 = vshrl.u32 %v507, %v523
    %v526 = vor.u32 %v524, %v525
    %v527 = vsub.s32 4294967266, %v522
    %v528 = vadd.s32 %v527, 127
    %v529 = vshll.u32 %v528, 23
    %v530 = vor.u32 4788187, %v529
    %v531 = vand.u32 2147483647, %v530
    %v533 = vcvt.s32.f32 %v526
    %v534 = vmul.f32 %v533, %v531
    %v535 = vxor.u32 %v534, 2147483648
    %v536 = vsel %vm453, %v535, %v534
    %v537 = vsub.s32 4, %v513
    %v538 = vsel %vm453, %v537, %v513
    %v539 = vsel %vm452, %v231, %v536
    %v540 = vsel %vm452, 0, %v538
    %v541 = vcosq.f32.pop %v539
    %v542 = vsinq.f32.pop %v539
    %vm543 = vweird.f32 %v231
    %v544 = vand.u32 %v540, 3
    %vm545 = vcmp.lt.s32.totalorder %v544, 2
    %vm546 = vcmp.eq.s32.totalorder %v544, 0
    %v547 = vxor.u32 %v542, 2147483648
    %v548 = vsel %vm546, %v541, %v547
    %vm549 = vcmp.eq.s32.totalorder %v544, 2
    %v550 = vxor.u32 %v541, 2147483648
    %v551 = vsel %vm549, %v550, %v542
    %v552 = vsel %vm545, %v548, %v551
    %v553 = vsel %vm543, nan, %v552
    %v554 = vand.u32 2147483647, %v232
    %vm555 = vcmp.le.f32.partialorder %v554, 0.7853982
    %vm556 = vcmp.lt.s32.totalorder %v232, 0
    %v557 = vand.u32 %v232, 2139095040
    %v558 = vshrl.u32 %v557, 23
    %v559 = vsub.s32 %v558, 127
    %v560 = vand.u32 2147483647, %v232
    %v561 = vand.u32 %v560, 8388607
    %v562 = vor.u32 %v561, 8388608
    %v563 = vsub.s32 0, %v562
    %v564 = vadd.s32 %v559, 1
    %vm565 = vcmp.gt.s32.totalorder %v564, 0
    %v566 = vsel %vm565, %v564, 0
    %v567 = vshrl.u32 %v566, 5
    %v568 = vand.u32 %v566, 31
    %v569 = vsub.s32 32, %v568
    %v570 = vshrl.u32 683565275, %v569
    %v571 = vshll.u32 683565275, %v568
    %v572 = vshrl.u32 2475754826, %v569
    %v573 = vor.u32 %v571, %v572
    %v574 = vshll.u32 2475754826, %v568
    %v575 = vshrl.u32 2131351028, %v569
    %v576 = vor.u32 %v574, %v575
    %v577 = vshll.u32 2131351028, %v568
    %v578 = vshrl.u32 2102212464, %v569
    %v579 = vor.u32 %v577, %v578
    %v580 = vshll.u32 2102212464, %v568
    %v581 = vshrl.u32 920167782, %v569
    %v582 = vor.u32 %v580, %v581
    %v583 = vshll.u32 920167782, %v568
    %v584 = vshrl.u32 1326507024, %v569
    %v585 = vor.u32 %v583, %v584
    %vm586 = vcmp.lt.s32.totalorder %v567, 1
    %vm587 = vcmp.lt.s32.totalorder %v567, 2
    %vm588 = vcmp.lt.s32.totalorder %v567, 3
    %vm589 = vcmp.lt.s32.totalorder %v567, 4
    %v590 = vsel %vm586, %v570, %v573
    %v591 = vsel %vm589, %v579, 2102212464
    %v592 = vsel %vm588, %v576, %v591
    %v593 = vsel %vm587, %v590, %v592
    %v594 = vsel %vm586, %v573, %v576
    %v595 = vsel %vm589, %v582, 920167782
    %v596 = vsel %vm588, %v579, %v595
    %v597 = vsel %vm587, %v594, %v596
    %v598 = vsel %vm586, %v576, %v579
    %v599 = vsel %vm589, %v585, 1326507024
    %v600 = vsel %vm588, %v582, %v599
    %v601 = vsel %vm587, %v598, %v600
    %v602 = vshll.u32 %v562, 8
    %v603 = vmul.u32.u64.compose %v602, %v601
    %v604 = vextract.low.u32 %v603
    %v605 = vextract.high.u32 %v603
    %v606 = vmul.u32.u64.compose %v602, %v597
    %v607 = vextract.low.u32 %v606
    %v608 = vextract.high.u32 %v606
    %v609 = vmul.u32 %v602, %v593
    %v610 = vadd.s32 %v605, %v607
    %vm611 = vc.u32 %v605, %v607
    %v612 = vadd.s32 %v608, 1
    %v613 = vsel %vm611, %v612, %v608
    %v614 = vadd.s32 %v609, %v613
    %v615 = vadd.s32 %v614, 536870912
    %v616 = vshrl.u32 %v615, 30
    %v617 = vshll.u32 %v616, 30
    %v618 = vsub.s32 %v614, %v617
    %vm619 = vcmp.lt.s32.totalorder %v618, 0
    %v620 = vsub.s32 0, %v618
    %v621 = vsel %vm619, %v620, %v618
    %v622 = vclz %v621
    %v623 = vsub.s32 %v622, 2
    %vm624 = vcmp.gt.s32.totalorder 0, %v623
    %v625 = vsel %vm624, 0, %v623
    %v626 = vsub.s32 32, %v625
    %v627 = vshll.u32 %v618, %v625
    %v628 = vshrl.u32 %v610, %v626
    %v629 = vor.u32 %v627, %v628
    %v630 = vsub.s32 4294967266, %v625
    %v631 = vadd.s32 %v630, 127
    %v632 = vshll.u32 %v631, 23
    %v633 = vor.u32 4788187, %v632
    %v634 = vand.u32 2147483647, %v633
    %v636 = vcvt.s32.f32 %v629
    %v637 = vmul.f32 %v636, %v634
    %v638 = vxor.u32 %v637, 2147483648
    %v639 = vsel %vm556, %v638, %v637
    %v640 = vsub.s32 4, %v616
    %v641 = vsel %vm556, %v640, %v616
    %v642 = vsel %vm555, %v232, %v639
    %v643 = vsel %vm555, 0, %v641
    %v644 = vcosq.f32.pop %v642
    %v645 = vsinq.f32.pop %v642
    %vm646 = vweird.f32 %v232
    %v647 = vand.u32 %v643, 3
    %vm648 = vcmp.lt.s32.totalorder %v647, 2
    %vm649 = vcmp.eq.s32.totalorder %v647, 0
    %v650 = vxor.u32 %v645, 2147483648
    %v651 = vsel %vm649, %v644, %v650
    %vm652 = vcmp.eq.s32.totalorder %v647, 2
    %v653 = vxor.u32 %v644, 2147483648
    %v654 = vsel %vm652, %v653, %v645
    %v655 = vsel %vm648, %v651, %v654
    %v656 = vsel %vm646, nan, %v655
    %v657 = vand.u32 2147483647, %v233
    %vm658 = vcmp.le.f32.partialorder %v657, 0.7853982
    %vm659 = vcmp.lt.s32.totalorder %v233, 0
    %v660 = vand.u32 %v233, 2139095040
    %v661 = vshrl.u32 %v660, 23
    %v662 = vsub.s32 %v661, 127
    %v663 = vand.u32 2147483647, %v233
    %v664 = vand.u32 %v663, 8388607
    %v665 = vor.u32 %v664, 8388608
    %v666 = vsub.s32 0, %v665
    %v667 = vadd.s32 %v662, 1
    %vm668 = vcmp.gt.s32.totalorder %v667, 0
    %v669 = vsel %vm668, %v667, 0
    %v670 = vshrl.u32 %v669, 5
    %v671 = vand.u32 %v669, 31
    %v672 = vsub.s32 32, %v671
    %v673 = vshrl.u32 683565275, %v672
    %v674 = vshll.u32 683565275, %v671
    %v675 = vshrl.u32 2475754826, %v672
    %v676 = vor.u32 %v674, %v675
    %v677 = vshll.u32 2475754826, %v671
    %v678 = vshrl.u32 2131351028, %v672
    %v679 = vor.u32 %v677, %v678
    %v680 = vshll.u32 2131351028, %v671
    %v681 = vshrl.u32 2102212464, %v672
    %v682 = vor.u32 %v680, %v681
    %v683 = vshll.u32 2102212464, %v671
    %v684 = vshrl.u32 920167782, %v672
    %v685 = vor.u32 %v683, %v684
    %v686 = vshll.u32 920167782, %v671
    %v687 = vshrl.u32 1326507024, %v672
    %v688 = vor.u32 %v686, %v687
    %vm689 = vcmp.lt.s32.totalorder %v670, 1
    %vm690 = vcmp.lt.s32.totalorder %v670, 2
    %vm691 = vcmp.lt.s32.totalorder %v670, 3
    %vm692 = vcmp.lt.s32.totalorder %v670, 4
    %v693 = vsel %vm689, %v673, %v676
    %v694 = vsel %vm692, %v682, 2102212464
    %v695 = vsel %vm691, %v679, %v694
    %v696 = vsel %vm690, %v693, %v695
    %v697 = vsel %vm689, %v676, %v679
    %v698 = vsel %vm692, %v685, 920167782
    %v699 = vsel %vm691, %v682, %v698
    %v700 = vsel %vm690, %v697, %v699
    %v701 = vsel %vm689, %v679, %v682
    %v702 = vsel %vm692, %v688, 1326507024
    %v703 = vsel %vm691, %v685, %v702
    %v704 = vsel %vm690, %v701, %v703
    %v705 = vshll.u32 %v665, 8
    %v706 = vmul.u32.u64.compose %v705, %v704
    %v707 = vextract.low.u32 %v706
    %v708 = vextract.high.u32 %v706
    %v709 = vmul.u32.u64.compose %v705, %v700
    %v710 = vextract.low.u32 %v709
    %v711 = vextract.high.u32 %v709
    %v712 = vmul.u32 %v705, %v696
    %v713 = vadd.s32 %v708, %v710
    %vm714 = vc.u32 %v708, %v710
    %v715 = vadd.s32 %v711, 1
    %v716 = vsel %vm714, %v715, %v711
    %v717 = vadd.s32 %v712, %v716
    %v718 = vadd.s32 %v717, 536870912
    %v719 = vshrl.u32 %v718, 30
    %v720 = vshll.u32 %v719, 30
    %v721 = vsub.s32 %v717, %v720
    %vm722 = vcmp.lt.s32.totalorder %v721, 0
    %v723 = vsub.s32 0, %v721
    %v724 = vsel %vm722, %v723, %v721
    %v725 = vclz %v724
    %v726 = vsub.s32 %v725, 2
    %vm727 = vcmp.gt.s32.totalorder 0, %v726
    %v728 = vsel %vm727, 0, %v726
    %v729 = vsub.s32 32, %v728
    %v730 = vshll.u32 %v721, %v728
    %v731 = vshrl.u32 %v713, %v729
    %v732 = vor.u32 %v730, %v731
    %v733 = vsub.s32 4294967266, %v728
    %v734 = vadd.s32 %v733, 127
    %v735 = vshll.u32 %v734, 23
    %v736 = vor.u32 4788187, %v735
    %v737 = vand.u32 2147483647, %v736
    %v739 = vcvt.s32.f32 %v732
    %v740 = vmul.f32 %v739, %v737
    %v741 = vxor.u32 %v740, 2147483648
    %v742 = vsel %vm659, %v741, %v740
    %v743 = vsub.s32 4, %v719
    %v744 = vsel %vm659, %v743, %v719
    %v745 = vsel %vm658, %v233, %v742
    %v746 = vsel %vm658, 0, %v744
    %v747 = vcosq.f32.pop %v745
    %v748 = vsinq.f32.pop %v745
    %vm749 = vweird.f32 %v233
    %v750 = vand.u32 %v746, 3
    %vm751 = vcmp.lt.s32.totalorder %v750, 2
    %vm752 = vcmp.eq.s32.totalorder %v750, 0
    %v753 = vxor.u32 %v748, 2147483648
    %v754 = vsel %vm752, %v747, %v753
    %vm755 = vcmp.eq.s32.totalorder %v750, 2
    %v756 = vxor.u32 %v747, 2147483648
    %v757 = vsel %vm755, %v756, %v748
    %v758 = vsel %vm751, %v754, %v757
    %v759 = vsel %vm749, nan, %v758
    %v760 = vand.u32 2147483647, %v234
    %vm761 = vcmp.le.f32.partialorder %v760, 0.7853982
    %vm762 = vcmp.lt.s32.totalorder %v234, 0
    %v763 = vand.u32 %v234, 2139095040
    %v764 = vshrl.u32 %v763, 23
    %v765 = vsub.s32 %v764, 127
    %v766 = vand.u32 2147483647, %v234
    %v767 = vand.u32 %v766, 8388607
    %v768 = vor.u32 %v767, 8388608
    %v769 = vsub.s32 0, %v768
    %v770 = vadd.s32 %v765, 1
    %vm771 = vcmp.gt.s32.totalorder %v770, 0
    %v772 = vsel %vm771, %v770, 0
    %v773 = vshrl.u32 %v772, 5
    %v774 = vand.u32 %v772, 31
    %v775 = vsub.s32 32, %v774
    %v776 = vshrl.u32 683565275, %v775
    %v777 = vshll.u32 683565275, %v774
    %v778 = vshrl.u32 2475754826, %v775
    %v779 = vor.u32 %v777, %v778
    %v780 = vshll.u32 2475754826, %v774
    %v781 = vshrl.u32 2131351028, %v775
    %v782 = vor.u32 %v780, %v781
    %v783 = vshll.u32 2131351028, %v774
    %v784 = vshrl.u32 2102212464, %v775
    %v785 = vor.u32 %v783, %v784
    %v786 = vshll.u32 2102212464, %v774
    %v787 = vshrl.u32 920167782, %v775
    %v788 = vor.u32 %v786, %v787
    %v789 = vshll.u32 920167782, %v774
    %v790 = vshrl.u32 1326507024, %v775
    %v791 = vor.u32 %v789, %v790
    %vm792 = vcmp.lt.s32.totalorder %v773, 1
    %vm793 = vcmp.lt.s32.totalorder %v773, 2
    %vm794 = vcmp.lt.s32.totalorder %v773, 3
    %vm795 = vcmp.lt.s32.totalorder %v773, 4
    %v796 = vsel %vm792, %v776, %v779
    %v797 = vsel %vm795, %v785, 2102212464
    %v798 = vsel %vm794, %v782, %v797
    %v799 = vsel %vm793, %v796, %v798
    %v800 = vsel %vm792, %v779, %v782
    %v801 = vsel %vm795, %v788, 920167782
    %v802 = vsel %vm794, %v785, %v801
    %v803 = vsel %vm793, %v800, %v802
    %v804 = vsel %vm792, %v782, %v785
    %v805 = vsel %vm795, %v791, 1326507024
    %v806 = vsel %vm794, %v788, %v805
    %v807 = vsel %vm793, %v804, %v806
    %v808 = vshll.u32 %v768, 8
    %v809 = vmul.u32.u64.compose %v808, %v807
    %v810 = vextract.low.u32 %v809
    %v811 = vextract.high.u32 %v809
    %v812 = vmul.u32.u64.compose %v808, %v803
    %v813 = vextract.low.u32 %v812
    %v814 = vextract.high.u32 %v812
    %v815 = vmul.u32 %v808, %v799
    %v816 = vadd.s32 %v811, %v813
    %vm817 = vc.u32 %v811, %v813
    %v818 = vadd.s32 %v814, 1
    %v819 = vsel %vm817, %v818, %v814
    %v820 = vadd.s32 %v815, %v819
    %v821 = vadd.s32 %v820, 536870912
    %v822 = vshrl.u32 %v821, 30
    %v823 = vshll.u32 %v822, 30
    %v824 = vsub.s32 %v820, %v823
    %vm825 = vcmp.lt.s32.totalorder %v824, 0
    %v826 = vsub.s32 0, %v824
    %v827 = vsel %vm825, %v826, %v824
    %v828 = vclz %v827
    %v829 = vsub.s32 %v828, 2
    %vm830 = vcmp.gt.s32.totalorder 0, %v829
    %v831 = vsel %vm830, 0, %v829
    %v832 = vsub.s32 32, %v831
    %v833 = vshll.u32 %v824, %v831
    %v834 = vshrl.u32 %v816, %v832
    %v835 = vor.u32 %v833, %v834
    %v836 = vsub.s32 4294967266, %v831
    %v837 = vadd.s32 %v836, 127
    %v838 = vshll.u32 %v837, 23
    %v839 = vor.u32 4788187, %v838
    %v840 = vand.u32 2147483647, %v839
    %v842 = vcvt.s32.f32 %v835
    %v843 = vmul.f32 %v842, %v840
    %v844 = vxor.u32 %v843, 2147483648
    %v845 = vsel %vm762, %v844, %v843
    %v846 = vsub.s32 4, %v822
    %v847 = vsel %vm762, %v846, %v822
    %v848 = vsel %vm761, %v234, %v845
    %v849 = vsel %vm761, 0, %v847
    %v850 = vcosq.f32.pop %v848
    %v851 = vsinq.f32.pop %v848
    %vm852 = vweird.f32 %v234
    %v853 = vand.u32 %v849, 3
    %vm854 = vcmp.lt.s32.totalorder %v853, 2
    %vm855 = vcmp.eq.s32.totalorder %v853, 0
    %v856 = vxor.u32 %v851, 2147483648
    %v857 = vsel %vm855, %v850, %v856
    %vm858 = vcmp.eq.s32.totalorder %v853, 2
    %v859 = vxor.u32 %v850, 2147483648
    %v860 = vsel %vm858, %v859, %v851
    %v861 = vsel %vm854, %v857, %v860
    %v862 = vsel %vm852, nan, %v861
    %v863 = vand.u32 2147483647, %v235
    %vm864 = vcmp.le.f32.partialorder %v863, 0.7853982
    %vm865 = vcmp.lt.s32.totalorder %v235, 0
    %v866 = vand.u32 %v235, 2139095040
    %v867 = vshrl.u32 %v866, 23
    %v868 = vsub.s32 %v867, 127
    %v869 = vand.u32 2147483647, %v235
    %v870 = vand.u32 %v869, 8388607
    %v871 = vor.u32 %v870, 8388608
    %v872 = vsub.s32 0, %v871
    %v873 = vadd.s32 %v868, 1
    %vm874 = vcmp.gt.s32.totalorder %v873, 0
    %v875 = vsel %vm874, %v873, 0
    %v876 = vshrl.u32 %v875, 5
    %v877 = vand.u32 %v875, 31
    %v878 = vsub.s32 32, %v877
    %v879 = vshrl.u32 683565275, %v878
    %v880 = vshll.u32 683565275, %v877
    %v881 = vshrl.u32 2475754826, %v878
    %v882 = vor.u32 %v880, %v881
    %v883 = vshll.u32 2475754826, %v877
    %v884 = vshrl.u32 2131351028, %v878
    %v885 = vor.u32 %v883, %v884
    %v886 = vshll.u32 2131351028, %v877
    %v887 = vshrl.u32 2102212464, %v878
    %v888 = vor.u32 %v886, %v887
    %v889 = vshll.u32 2102212464, %v877
    %v890 = vshrl.u32 920167782, %v878
    %v891 = vor.u32 %v889, %v890
    %v892 = vshll.u32 920167782, %v877
    %v893 = vshrl.u32 1326507024, %v878
    %v894 = vor.u32 %v892, %v893
    %vm895 = vcmp.lt.s32.totalorder %v876, 1
    %vm896 = vcmp.lt.s32.totalorder %v876, 2
    %vm897 = vcmp.lt.s32.totalorder %v876, 3
    %vm898 = vcmp.lt.s32.totalorder %v876, 4
    %v899 = vsel %vm895, %v879, %v882
    %v900 = vsel %vm898, %v888, 2102212464
    %v901 = vsel %vm897, %v885, %v900
    %v902 = vsel %vm896, %v899, %v901
    %v903 = vsel %vm895, %v882, %v885
    %v904 = vsel %vm898, %v891, 920167782
    %v905 = vsel %vm897, %v888, %v904
    %v906 = vsel %vm896, %v903, %v905
    %v907 = vsel %vm895, %v885, %v888
    %v908 = vsel %vm898, %v894, 1326507024
    %v909 = vsel %vm897, %v891, %v908
    %v910 = vsel %vm896, %v907, %v909
    %v911 = vshll.u32 %v871, 8
    %v912 = vmul.u32.u64.compose %v911, %v910
    %v913 = vextract.low.u32 %v912
    %v914 = vextract.high.u32 %v912
    %v915 = vmul.u32.u64.compose %v911, %v906
    %v916 = vextract.low.u32 %v915
    %v917 = vextract.high.u32 %v915
    %v918 = vmul.u32 %v911, %v902
    %v919 = vadd.s32 %v914, %v916
    %vm920 = vc.u32 %v914, %v916
    %v921 = vadd.s32 %v917, 1
    %v922 = vsel %vm920, %v921, %v917
    %v923 = vadd.s32 %v918, %v922
    %v924 = vadd.s32 %v923, 536870912
    %v925 = vshrl.u32 %v924, 30
    %v926 = vshll.u32 %v925, 30
    %v927 = vsub.s32 %v923, %v926
    %vm928 = vcmp.lt.s32.totalorder %v927, 0
    %v929 = vsub.s32 0, %v927
    %v930 = vsel %vm928, %v929, %v927
    %v931 = vclz %v930
    %v932 = vsub.s32 %v931, 2
    %vm933 = vcmp.gt.s32.totalorder 0, %v932
    %v934 = vsel %vm933, 0, %v932
    %v935 = vsub.s32 32, %v934
    %v936 = vshll.u32 %v927, %v934
    %v937 = vshrl.u32 %v919, %v935
    %v938 = vor.u32 %v936, %v937
    %v939 = vsub.s32 4294967266, %v934
    %v940 = vadd.s32 %v939, 127
    %v941 = vshll.u32 %v940, 23
    %v942 = vor.u32 4788187, %v941
    %v943 = vand.u32 2147483647, %v942
    %v945 = vcvt.s32.f32 %v938
    %v946 = vmul.f32 %v945, %v943
    %v947 = vxor.u32 %v946, 2147483648
    %v948 = vsel %vm865, %v947, %v946
    %v949 = vsub.s32 4, %v925
    %v950 = vsel %vm865, %v949, %v925
    %v951 = vsel %vm864, %v235, %v948
    %v952 = vsel %vm864, 0, %v950
    %v953 = vcosq.f32.pop %v951
    %v954 = vsinq.f32.pop %v951
    %vm955 = vweird.f32 %v235
    %v956 = vand.u32 %v952, 3
    %vm957 = vcmp.lt.s32.totalorder %v956, 2
    %vm958 = vcmp.eq.s32.totalorder %v956, 0
    %v959 = vxor.u32 %v954, 2147483648
    %v960 = vsel %vm958, %v953, %v959
    %vm961 = vcmp.eq.s32.totalorder %v956, 2
    %v962 = vxor.u32 %v953, 2147483648
    %v963 = vsel %vm961, %v962, %v954
    %v964 = vsel %vm957, %v960, %v963
    %v965 = vsel %vm955, nan, %v964
    %v966 = vand.u32 2147483647, %v236
    %vm967 = vcmp.le.f32.partialorder %v966, 0.7853982
    %vm968 = vcmp.lt.s32.totalorder %v236, 0
    %v969 = vand.u32 %v236, 2139095040
    %v970 = vshrl.u32 %v969, 23
    %v971 = vsub.s32 %v970, 127
    %v972 = vand.u32 2147483647, %v236
    %v973 = vand.u32 %v972, 8388607
    %v974 = vor.u32 %v973, 8388608
    %v975 = vsub.s32 0, %v974
    %v976 = vadd.s32 %v971, 1
    %vm977 = vcmp.gt.s32.totalorder %v976, 0
    %v978 = vsel %vm977, %v976, 0
    %v979 = vshrl.u32 %v978, 5
    %v980 = vand.u32 %v978, 31
    %v981 = vsub.s32 32, %v980
    %v982 = vshrl.u32 683565275, %v981
    %v983 = vshll.u32 683565275, %v980
    %v984 = vshrl.u32 2475754826, %v981
    %v985 = vor.u32 %v983, %v984
    %v986 = vshll.u32 2475754826, %v980
    %v987 = vshrl.u32 2131351028, %v981
    %v988 = vor.u32 %v986, %v987
    %v989 = vshll.u32 2131351028, %v980
    %v990 = vshrl.u32 2102212464, %v981
    %v991 = vor.u32 %v989, %v990
    %v992 = vshll.u32 2102212464, %v980
    %v993 = vshrl.u32 920167782, %v981
    %v994 = vor.u32 %v992, %v993
    %v995 = vshll.u32 920167782, %v980
    %v996 = vshrl.u32 1326507024, %v981
    %v997 = vor.u32 %v995, %v996
    %vm998 = vcmp.lt.s32.totalorder %v979, 1
    %vm999 = vcmp.lt.s32.totalorder %v979, 2
    %vm1000 = vcmp.lt.s32.totalorder %v979, 3
    %vm1001 = vcmp.lt.s32.totalorder %v979, 4
    %v1002 = vsel %vm998, %v982, %v985
    %v1003 = vsel %vm1001, %v991, 2102212464
    %v1004 = vsel %vm1000, %v988, %v1003
    %v1005 = vsel %vm999, %v1002, %v1004
    %v1006 = vsel %vm998, %v985, %v988
    %v1007 = vsel %vm1001, %v994, 920167782
    %v1008 = vsel %vm1000, %v991, %v1007
    %v1009 = vsel %vm999, %v1006, %v1008
    %v1010 = vsel %vm998, %v988, %v991
    %v1011 = vsel %vm1001, %v997, 1326507024
    %v1012 = vsel %vm1000, %v994, %v1011
    %v1013 = vsel %vm999, %v1010, %v1012
    %v1014 = vshll.u32 %v974, 8
    %v1015 = vmul.u32.u64.compose %v1014, %v1013
    %v1016 = vextract.low.u32 %v1015
    %v1017 = vextract.high.u32 %v1015
    %v1018 = vmul.u32.u64.compose %v1014, %v1009
    %v1019 = vextract.low.u32 %v1018
    %v1020 = vextract.high.u32 %v1018
    %v1021 = vmul.u32 %v1014, %v1005
    %v1022 = vadd.s32 %v1017, %v1019
    %vm1023 = vc.u32 %v1017, %v1019
    %v1024 = vadd.s32 %v1020, 1
    %v1025 = vsel %vm1023, %v1024, %v1020
    %v1026 = vadd.s32 %v1021, %v1025
    %v1027 = vadd.s32 %v1026, 536870912
    %v1028 = vshrl.u32 %v1027, 30
    %v1029 = vshll.u32 %v1028, 30
    %v1030 = vsub.s32 %v1026, %v1029
    %vm1031 = vcmp.lt.s32.totalorder %v1030, 0
    %v1032 = vsub.s32 0, %v1030
    %v1033 = vsel %vm1031, %v1032, %v1030
    %v1034 = vclz %v1033
    %v1035 = vsub.s32 %v1034, 2
    %vm1036 = vcmp.gt.s32.totalorder 0, %v1035
    %v1037 = vsel %vm1036, 0, %v1035
    %v1038 = vsub.s32 32, %v1037
    %v1039 = vshll.u32 %v1030, %v1037
    %v1040 = vshrl.u32 %v1022, %v1038
    %v1041 = vor.u32 %v1039, %v1040
    %v1042 = vsub.s32 4294967266, %v1037
    %v1043 = vadd.s32 %v1042, 127
    %v1044 = vshll.u32 %v1043, 23
    %v1045 = vor.u32 4788187, %v1044
    %v1046 = vand.u32 2147483647, %v1045
    %v1048 = vcvt.s32.f32 %v1041
    %v1049 = vmul.f32 %v1048, %v1046
    %v1050 = vxor.u32 %v1049, 2147483648
    %v1051 = vsel %vm968, %v1050, %v1049
    %v1052 = vsub.s32 4, %v1028
    %v1053 = vsel %vm968, %v1052, %v1028
    %v1054 = vsel %vm967, %v236, %v1051
    %v1055 = vsel %vm967, 0, %v1053
    %v1056 = vcosq.f32.pop %v1054
    %v1057 = vsinq.f32.pop %v1054
    %vm1058 = vweird.f32 %v236
    %v1059 = vand.u32 %v1055, 3
    %vm1060 = vcmp.lt.s32.totalorder %v1059, 2
    %vm1061 = vcmp.eq.s32.totalorder %v1059, 0
    %v1062 = vxor.u32 %v1057, 2147483648
    %v1063 = vsel %vm1061, %v1056, %v1062
    %vm1064 = vcmp.eq.s32.totalorder %v1059, 2
    %v1065 = vxor.u32 %v1056, 2147483648
    %v1066 = vsel %vm1064, %v1065, %v1057
    %v1067 = vsel %vm1060, %v1063, %v1066
    %v1068 = vsel %vm1058, nan, %v1067
    %v1069 = vand.u32 2147483647, %v237
    %vm1070 = vcmp.le.f32.partialorder %v1069, 0.7853982
    %vm1071 = vcmp.lt.s32.totalorder %v237, 0
    %v1072 = vand.u32 %v237, 2139095040
    %v1073 = vshrl.u32 %v1072, 23
    %v1074 = vsub.s32 %v1073, 127
    %v1075 = vand.u32 2147483647, %v237
    %v1076 = vand.u32 %v1075, 8388607
    %v1077 = vor.u32 %v1076, 8388608
    %v1078 = vsub.s32 0, %v1077
    %v1079 = vadd.s32 %v1074, 1
    %vm1080 = vcmp.gt.s32.totalorder %v1079, 0
    %v1081 = vsel %vm1080, %v1079, 0
    %v1082 = vshrl.u32 %v1081, 5
    %v1083 = vand.u32 %v1081, 31
    %v1084 = vsub.s32 32, %v1083
    %v1085 = vshrl.u32 683565275, %v1084
    %v1086 = vshll.u32 683565275, %v1083
    %v1087 = vshrl.u32 2475754826, %v1084
    %v1088 = vor.u32 %v1086, %v1087
    %v1089 = vshll.u32 2475754826, %v1083
    %v1090 = vshrl.u32 2131351028, %v1084
    %v1091 = vor.u32 %v1089, %v1090
    %v1092 = vshll.u32 2131351028, %v1083
    %v1093 = vshrl.u32 2102212464, %v1084
    %v1094 = vor.u32 %v1092, %v1093
    %v1095 = vshll.u32 2102212464, %v1083
    %v1096 = vshrl.u32 920167782, %v1084
    %v1097 = vor.u32 %v1095, %v1096
    %v1098 = vshll.u32 920167782, %v1083
    %v1099 = vshrl.u32 1326507024, %v1084
    %v1100 = vor.u32 %v1098, %v1099
    %vm1101 = vcmp.lt.s32.totalorder %v1082, 1
    %vm1102 = vcmp.lt.s32.totalorder %v1082, 2
    %vm1103 = vcmp.lt.s32.totalorder %v1082, 3
    %vm1104 = vcmp.lt.s32.totalorder %v1082, 4
    %v1105 = vsel %vm1101, %v1085, %v1088
    %v1106 = vsel %vm1104, %v1094, 2102212464
    %v1107 = vsel %vm1103, %v1091, %v1106
    %v1108 = vsel %vm1102, %v1105, %v1107
    %v1109 = vsel %vm1101, %v1088, %v1091
    %v1110 = vsel %vm1104, %v1097, 920167782
    %v1111 = vsel %vm1103, %v1094, %v1110
    %v1112 = vsel %vm1102, %v1109, %v1111
    %v1113 = vsel %vm1101, %v1091, %v1094
    %v1114 = vsel %vm1104, %v1100, 1326507024
    %v1115 = vsel %vm1103, %v1097, %v1114
    %v1116 = vsel %vm1102, %v1113, %v1115
    %v1117 = vshll.u32 %v1077, 8
    %v1118 = vmul.u32.u64.compose %v1117, %v1116
    %v1119 = vextract.low.u32 %v1118
    %v1120 = vextract.high.u32 %v1118
    %v1121 = vmul.u32.u64.compose %v1117, %v1112
    %v1122 = vextract.low.u32 %v1121
    %v1123 = vextract.high.u32 %v1121
    %v1124 = vmul.u32 %v1117, %v1108
    %v1125 = vadd.s32 %v1120, %v1122
    %vm1126 = vc.u32 %v1120, %v1122
    %v1127 = vadd.s32 %v1123, 1
    %v1128 = vsel %vm1126, %v1127, %v1123
    %v1129 = vadd.s32 %v1124, %v1128
    %v1130 = vadd.s32 %v1129, 536870912
    %v1131 = vshrl.u32 %v1130, 30
    %v1132 = vshll.u32 %v1131, 30
    %v1133 = vsub.s32 %v1129, %v1132
    %vm1134 = vcmp.lt.s32.totalorder %v1133, 0
    %v1135 = vsub.s32 0, %v1133
    %v1136 = vsel %vm1134, %v1135, %v1133
    %v1137 = vclz %v1136
    %v1138 = vsub.s32 %v1137, 2
    %vm1139 = vcmp.gt.s32.totalorder 0, %v1138
    %v1140 = vsel %vm1139, 0, %v1138
    %v1141 = vsub.s32 32, %v1140
    %v1142 = vshll.u32 %v1133, %v1140
    %v1143 = vshrl.u32 %v1125, %v1141
    %v1144 = vor.u32 %v1142, %v1143
    %v1145 = vsub.s32 4294967266, %v1140
    %v1146 = vadd.s32 %v1145, 127
    %v1147 = vshll.u32 %v1146, 23
    %v1148 = vor.u32 4788187, %v1147
    %v1149 = vand.u32 2147483647, %v1148
    %v1151 = vcvt.s32.f32 %v1144
    %v1152 = vmul.f32 %v1151, %v1149
    %v1153 = vxor.u32 %v1152, 2147483648
    %v1154 = vsel %vm1071, %v1153, %v1152
    %v1155 = vsub.s32 4, %v1131
    %v1156 = vsel %vm1071, %v1155, %v1131
    %v1157 = vsel %vm1070, %v237, %v1154
    %v1158 = vsel %vm1070, 0, %v1156
    %v1159 = vcosq.f32.pop %v1157
    %v1160 = vsinq.f32.pop %v1157
    %vm1161 = vweird.f32 %v237
    %v1162 = vand.u32 %v1158, 3
    %vm1163 = vcmp.lt.s32.totalorder %v1162, 2
    %vm1164 = vcmp.eq.s32.totalorder %v1162, 0
    %v1165 = vxor.u32 %v1160, 2147483648
    %v1166 = vsel %vm1164, %v1159, %v1165
    %vm1167 = vcmp.eq.s32.totalorder %v1162, 2
    %v1168 = vxor.u32 %v1159, 2147483648
    %v1169 = vsel %vm1167, %v1168, %v1160
    %v1170 = vsel %vm1163, %v1166, %v1169
    %v1171 = vsel %vm1161, nan, %v1170
    %v1172 = vand.u32 2147483647, %v238
    %vm1173 = vcmp.le.f32.partialorder %v1172, 0.7853982
    %vm1174 = vcmp.lt.s32.totalorder %v238, 0
    %v1175 = vand.u32 %v238, 2139095040
    %v1176 = vshrl.u32 %v1175, 23
    %v1177 = vsub.s32 %v1176, 127
    %v1178 = vand.u32 2147483647, %v238
    %v1179 = vand.u32 %v1178, 8388607
    %v1180 = vor.u32 %v1179, 8388608
    %v1181 = vsub.s32 0, %v1180
    %v1182 = vadd.s32 %v1177, 1
    %vm1183 = vcmp.gt.s32.totalorder %v1182, 0
    %v1184 = vsel %vm1183, %v1182, 0
    %v1185 = vshrl.u32 %v1184, 5
    %v1186 = vand.u32 %v1184, 31
    %v1187 = vsub.s32 32, %v1186
    %v1188 = vshrl.u32 683565275, %v1187
    %v1189 = vshll.u32 683565275, %v1186
    %v1190 = vshrl.u32 2475754826, %v1187
    %v1191 = vor.u32 %v1189, %v1190
    %v1192 = vshll.u32 2475754826, %v1186
    %v1193 = vshrl.u32 2131351028, %v1187
    %v1194 = vor.u32 %v1192, %v1193
    %v1195 = vshll.u32 2131351028, %v1186
    %v1196 = vshrl.u32 2102212464, %v1187
    %v1197 = vor.u32 %v1195, %v1196
    %v1198 = vshll.u32 2102212464, %v1186
    %v1199 = vshrl.u32 920167782, %v1187
    %v1200 = vor.u32 %v1198, %v1199
    %v1201 = vshll.u32 920167782, %v1186
    %v1202 = vshrl.u32 1326507024, %v1187
    %v1203 = vor.u32 %v1201, %v1202
    %vm1204 = vcmp.lt.s32.totalorder %v1185, 1
    %vm1205 = vcmp.lt.s32.totalorder %v1185, 2
    %vm1206 = vcmp.lt.s32.totalorder %v1185, 3
    %vm1207 = vcmp.lt.s32.totalorder %v1185, 4
    %v1208 = vsel %vm1204, %v1188, %v1191
    %v1209 = vsel %vm1207, %v1197, 2102212464
    %v1210 = vsel %vm1206, %v1194, %v1209
    %v1211 = vsel %vm1205, %v1208, %v1210
    %v1212 = vsel %vm1204, %v1191, %v1194
    %v1213 = vsel %vm1207, %v1200, 920167782
    %v1214 = vsel %vm1206, %v1197, %v1213
    %v1215 = vsel %vm1205, %v1212, %v1214
    %v1216 = vsel %vm1204, %v1194, %v1197
    %v1217 = vsel %vm1207, %v1203, 1326507024
    %v1218 = vsel %vm1206, %v1200, %v1217
    %v1219 = vsel %vm1205, %v1216, %v1218
    %v1220 = vshll.u32 %v1180, 8
    %v1221 = vmul.u32.u64.compose %v1220, %v1219
    %v1222 = vextract.low.u32 %v1221
    %v1223 = vextract.high.u32 %v1221
    %v1224 = vmul.u32.u64.compose %v1220, %v1215
    %v1225 = vextract.low.u32 %v1224
    %v1226 = vextract.high.u32 %v1224
    %v1227 = vmul.u32 %v1220, %v1211
    %v1228 = vadd.s32 %v1223, %v1225
    %vm1229 = vc.u32 %v1223, %v1225
    %v1230 = vadd.s32 %v1226, 1
    %v1231 = vsel %vm1229, %v1230, %v1226
    %v1232 = vadd.s32 %v1227, %v1231
    %v1233 = vadd.s32 %v1232, 536870912
    %v1234 = vshrl.u32 %v1233, 30
    %v1235 = vshll.u32 %v1234, 30
    %v1236 = vsub.s32 %v1232, %v1235
    %vm1237 = vcmp.lt.s32.totalorder %v1236, 0
    %v1238 = vsub.s32 0, %v1236
    %v1239 = vsel %vm1237, %v1238, %v1236
    %v1240 = vclz %v1239
    %v1241 = vsub.s32 %v1240, 2
    %vm1242 = vcmp.gt.s32.totalorder 0, %v1241
    %v1243 = vsel %vm1242, 0, %v1241
    %v1244 = vsub.s32 32, %v1243
    %v1245 = vshll.u32 %v1236, %v1243
    %v1246 = vshrl.u32 %v1228, %v1244
    %v1247 = vor.u32 %v1245, %v1246
    %v1248 = vsub.s32 4294967266, %v1243
    %v1249 = vadd.s32 %v1248, 127
    %v1250 = vshll.u32 %v1249, 23
    %v1251 = vor.u32 4788187, %v1250
    %v1252 = vand.u32 2147483647, %v1251
    %v1254 = vcvt.s32.f32 %v1247
    %v1255 = vmul.f32 %v1254, %v1252
    %v1256 = vxor.u32 %v1255, 2147483648
    %v1257 = vsel %vm1174, %v1256, %v1255
    %v1258 = vsub.s32 4, %v1234
    %v1259 = vsel %vm1174, %v1258, %v1234
    %v1260 = vsel %vm1173, %v238, %v1257
    %v1261 = vsel %vm1173, 0, %v1259
    %v1262 = vcosq.f32.pop %v1260
    %v1263 = vsinq.f32.pop %v1260
    %vm1264 = vweird.f32 %v238
    %v1265 = vand.u32 %v1261, 3
    %vm1266 = vcmp.lt.s32.totalorder %v1265, 2
    %vm1267 = vcmp.eq.s32.totalorder %v1265, 0
    %v1268 = vxor.u32 %v1263, 2147483648
    %v1269 = vsel %vm1267, %v1262, %v1268
    %vm1270 = vcmp.eq.s32.totalorder %v1265, 2
    %v1271 = vxor.u32 %v1262, 2147483648
    %v1272 = vsel %vm1270, %v1271, %v1263
    %v1273 = vsel %vm1266, %v1269, %v1272
    %v1274 = vsel %vm1264, nan, %v1273
    %v1275 = vand.u32 2147483647, %v239
    %vm1276 = vcmp.le.f32.partialorder %v1275, 0.7853982
    %vm1277 = vcmp.lt.s32.totalorder %v239, 0
    %v1278 = vand.u32 %v239, 2139095040
    %v1279 = vshrl.u32 %v1278, 23
    %v1280 = vsub.s32 %v1279, 127
    %v1281 = vand.u32 2147483647, %v239
    %v1282 = vand.u32 %v1281, 8388607
    %v1283 = vor.u32 %v1282, 8388608
    %v1284 = vsub.s32 0, %v1283
    %v1285 = vadd.s32 %v1280, 1
    %vm1286 = vcmp.gt.s32.totalorder %v1285, 0
    %v1287 = vsel %vm1286, %v1285, 0
    %v1288 = vshrl.u32 %v1287, 5
    %v1289 = vand.u32 %v1287, 31
    %v1290 = vsub.s32 32, %v1289
    %v1291 = vshrl.u32 683565275, %v1290
    %v1292 = vshll.u32 683565275, %v1289
    %v1293 = vshrl.u32 2475754826, %v1290
    %v1294 = vor.u32 %v1292, %v1293
    %v1295 = vshll.u32 2475754826, %v1289
    %v1296 = vshrl.u32 2131351028, %v1290
    %v1297 = vor.u32 %v1295, %v1296
    %v1298 = vshll.u32 2131351028, %v1289
    %v1299 = vshrl.u32 2102212464, %v1290
    %v1300 = vor.u32 %v1298, %v1299
    %v1301 = vshll.u32 2102212464, %v1289
    %v1302 = vshrl.u32 920167782, %v1290
    %v1303 = vor.u32 %v1301, %v1302
    %v1304 = vshll.u32 920167782, %v1289
    %v1305 = vshrl.u32 1326507024, %v1290
    %v1306 = vor.u32 %v1304, %v1305
    %vm1307 = vcmp.lt.s32.totalorder %v1288, 1
    %vm1308 = vcmp.lt.s32.totalorder %v1288, 2
    %vm1309 = vcmp.lt.s32.totalorder %v1288, 3
    %vm1310 = vcmp.lt.s32.totalorder %v1288, 4
    %v1311 = vsel %vm1307, %v1291, %v1294
    %v1312 = vsel %vm1310, %v1300, 2102212464
    %v1313 = vsel %vm1309, %v1297, %v1312
    %v1314 = vsel %vm1308, %v1311, %v1313
    %v1315 = vsel %vm1307, %v1294, %v1297
    %v1316 = vsel %vm1310, %v1303, 920167782
    %v1317 = vsel %vm1309, %v1300, %v1316
    %v1318 = vsel %vm1308, %v1315, %v1317
    %v1319 = vsel %vm1307, %v1297, %v1300
    %v1320 = vsel %vm1310, %v1306, 1326507024
    %v1321 = vsel %vm1309, %v1303, %v1320
    %v1322 = vsel %vm1308, %v1319, %v1321
    %v1323 = vshll.u32 %v1283, 8
    %v1324 = vmul.u32.u64.compose %v1323, %v1322
    %v1325 = vextract.low.u32 %v1324
    %v1326 = vextract.high.u32 %v1324
    %v1327 = vmul.u32.u64.compose %v1323, %v1318
    %v1328 = vextract.low.u32 %v1327
    %v1329 = vextract.high.u32 %v1327
    %v1330 = vmul.u32 %v1323, %v1314
    %v1331 = vadd.s32 %v1326, %v1328
    %vm1332 = vc.u32 %v1326, %v1328
    %v1333 = vadd.s32 %v1329, 1
    %v1334 = vsel %vm1332, %v1333, %v1329
    %v1335 = vadd.s32 %v1330, %v1334
    %v1336 = vadd.s32 %v1335, 536870912
    %v1337 = vshrl.u32 %v1336, 30
    %v1338 = vshll.u32 %v1337, 30
    %v1339 = vsub.s32 %v1335, %v1338
    %vm1340 = vcmp.lt.s32.totalorder %v1339, 0
    %v1341 = vsub.s32 0, %v1339
    %v1342 = vsel %vm1340, %v1341, %v1339
    %v1343 = vclz %v1342
    %v1344 = vsub.s32 %v1343, 2
    %vm1345 = vcmp.gt.s32.totalorder 0, %v1344
    %v1346 = vsel %vm1345, 0, %v1344
    %v1347 = vsub.s32 32, %v1346
    %v1348 = vshll.u32 %v1339, %v1346
    %v1349 = vshrl.u32 %v1331, %v1347
    %v1350 = vor.u32 %v1348, %v1349
    %v1351 = vsub.s32 4294967266, %v1346
    %v1352 = vadd.s32 %v1351, 127
    %v1353 = vshll.u32 %v1352, 23
    %v1354 = vor.u32 4788187, %v1353
    %v1355 = vand.u32 2147483647, %v1354
    %v1357 = vcvt.s32.f32 %v1350
    %v1358 = vmul.f32 %v1357, %v1355
    %v1359 = vxor.u32 %v1358, 2147483648
    %v1360 = vsel %vm1277, %v1359, %v1358
    %v1361 = vsub.s32 4, %v1337
    %v1362 = vsel %vm1277, %v1361, %v1337
    %v1363 = vsel %vm1276, %v239, %v1360
    %v1364 = vsel %vm1276, 0, %v1362
    %v1365 = vcosq.f32.pop %v1363
    %v1366 = vsinq.f32.pop %v1363
    %vm1367 = vweird.f32 %v239
    %v1368 = vand.u32 %v1364, 3
    %vm1369 = vcmp.lt.s32.totalorder %v1368, 2
    %vm1370 = vcmp.eq.s32.totalorder %v1368, 0
    %v1371 = vxor.u32 %v1366, 2147483648
    %v1372 = vsel %vm1370, %v1365, %v1371
    %vm1373 = vcmp.eq.s32.totalorder %v1368, 2
    %v1374 = vxor.u32 %v1365, 2147483648
    %v1375 = vsel %vm1373, %v1374, %v1366
    %v1376 = vsel %vm1369, %v1372, %v1375
    %v1377 = vsel %vm1367, nan, %v1376
    %v1378 = vand.u32 2147483647, %v240
    %vm1379 = vcmp.le.f32.partialorder %v1378, 0.7853982
    %vm1380 = vcmp.lt.s32.totalorder %v240, 0
    %v1381 = vand.u32 %v240, 2139095040
    %v1382 = vshrl.u32 %v1381, 23
    %v1383 = vsub.s32 %v1382, 127
    %v1384 = vand.u32 2147483647, %v240
    %v1385 = vand.u32 %v1384, 8388607
    %v1386 = vor.u32 %v1385, 8388608
    %v1387 = vsub.s32 0, %v1386
    %v1388 = vadd.s32 %v1383, 1
    %vm1389 = vcmp.gt.s32.totalorder %v1388, 0
    %v1390 = vsel %vm1389, %v1388, 0
    %v1391 = vshrl.u32 %v1390, 5
    %v1392 = vand.u32 %v1390, 31
    %v1393 = vsub.s32 32, %v1392
    %v1394 = vshrl.u32 683565275, %v1393
    %v1395 = vshll.u32 683565275, %v1392
    %v1396 = vshrl.u32 2475754826, %v1393
    %v1397 = vor.u32 %v1395, %v1396
    %v1398 = vshll.u32 2475754826, %v1392
    %v1399 = vshrl.u32 2131351028, %v1393
    %v1400 = vor.u32 %v1398, %v1399
    %v1401 = vshll.u32 2131351028, %v1392
    %v1402 = vshrl.u32 2102212464, %v1393
    %v1403 = vor.u32 %v1401, %v1402
    %v1404 = vshll.u32 2102212464, %v1392
    %v1405 = vshrl.u32 920167782, %v1393
    %v1406 = vor.u32 %v1404, %v1405
    %v1407 = vshll.u32 920167782, %v1392
    %v1408 = vshrl.u32 1326507024, %v1393
    %v1409 = vor.u32 %v1407, %v1408
    %vm1410 = vcmp.lt.s32.totalorder %v1391, 1
    %vm1411 = vcmp.lt.s32.totalorder %v1391, 2
    %vm1412 = vcmp.lt.s32.totalorder %v1391, 3
    %vm1413 = vcmp.lt.s32.totalorder %v1391, 4
    %v1414 = vsel %vm1410, %v1394, %v1397
    %v1415 = vsel %vm1413, %v1403, 2102212464
    %v1416 = vsel %vm1412, %v1400, %v1415
    %v1417 = vsel %vm1411, %v1414, %v1416
    %v1418 = vsel %vm1410, %v1397, %v1400
    %v1419 = vsel %vm1413, %v1406, 920167782
    %v1420 = vsel %vm1412, %v1403, %v1419
    %v1421 = vsel %vm1411, %v1418, %v1420
    %v1422 = vsel %vm1410, %v1400, %v1403
    %v1423 = vsel %vm1413, %v1409, 1326507024
    %v1424 = vsel %vm1412, %v1406, %v1423
    %v1425 = vsel %vm1411, %v1422, %v1424
    %v1426 = vshll.u32 %v1386, 8
    %v1427 = vmul.u32.u64.compose %v1426, %v1425
    %v1428 = vextract.low.u32 %v1427
    %v1429 = vextract.high.u32 %v1427
    %v1430 = vmul.u32.u64.compose %v1426, %v1421
    %v1431 = vextract.low.u32 %v1430
    %v1432 = vextract.high.u32 %v1430
    %v1433 = vmul.u32 %v1426, %v1417
    %v1434 = vadd.s32 %v1429, %v1431
    %vm1435 = vc.u32 %v1429, %v1431
    %v1436 = vadd.s32 %v1432, 1
    %v1437 = vsel %vm1435, %v1436, %v1432
    %v1438 = vadd.s32 %v1433, %v1437
    %v1439 = vadd.s32 %v1438, 536870912
    %v1440 = vshrl.u32 %v1439, 30
    %v1441 = vshll.u32 %v1440, 30
    %v1442 = vsub.s32 %v1438, %v1441
    %vm1443 = vcmp.lt.s32.totalorder %v1442, 0
    %v1444 = vsub.s32 0, %v1442
    %v1445 = vsel %vm1443, %v1444, %v1442
    %v1446 = vclz %v1445
    %v1447 = vsub.s32 %v1446, 2
    %vm1448 = vcmp.gt.s32.totalorder 0, %v1447
    %v1449 = vsel %vm1448, 0, %v1447
    %v1450 = vsub.s32 32, %v1449
    %v1451 = vshll.u32 %v1442, %v1449
    %v1452 = vshrl.u32 %v1434, %v1450
    %v1453 = vor.u32 %v1451, %v1452
    %v1454 = vsub.s32 4294967266, %v1449
    %v1455 = vadd.s32 %v1454, 127
    %v1456 = vshll.u32 %v1455, 23
    %v1457 = vor.u32 4788187, %v1456
    %v1458 = vand.u32 2147483647, %v1457
    %v1460 = vcvt.s32.f32 %v1453
    %v1461 = vmul.f32 %v1460, %v1458
    %v1462 = vxor.u32 %v1461, 2147483648
    %v1463 = vsel %vm1380, %v1462, %v1461
    %v1464 = vsub.s32 4, %v1440
    %v1465 = vsel %vm1380, %v1464, %v1440
    %v1466 = vsel %vm1379, %v240, %v1463
    %v1467 = vsel %vm1379, 0, %v1465
    %v1468 = vcosq.f32.pop %v1466
    %v1469 = vsinq.f32.pop %v1466
    %vm1470 = vweird.f32 %v240
    %v1471 = vand.u32 %v1467, 3
    %vm1472 = vcmp.lt.s32.totalorder %v1471, 2
    %vm1473 = vcmp.eq.s32.totalorder %v1471, 0
    %v1474 = vxor.u32 %v1469, 2147483648
    %v1475 = vsel %vm1473, %v1468, %v1474
    %vm1476 = vcmp.eq.s32.totalorder %v1471, 2
    %v1477 = vxor.u32 %v1468, 2147483648
    %v1478 = vsel %vm1476, %v1477, %v1469
    %v1479 = vsel %vm1472, %v1475, %v1478
    %v1480 = vsel %vm1470, nan, %v1479
    %v1481 = vand.u32 2147483647, %v241
    %vm1482 = vcmp.le.f32.partialorder %v1481, 0.7853982
    %vm1483 = vcmp.lt.s32.totalorder %v241, 0
    %v1484 = vand.u32 %v241, 2139095040
    %v1485 = vshrl.u32 %v1484, 23
    %v1486 = vsub.s32 %v1485, 127
    %v1487 = vand.u32 2147483647, %v241
    %v1488 = vand.u32 %v1487, 8388607
    %v1489 = vor.u32 %v1488, 8388608
    %v1490 = vsub.s32 0, %v1489
    %v1491 = vadd.s32 %v1486, 1
    %vm1492 = vcmp.gt.s32.totalorder %v1491, 0
    %v1493 = vsel %vm1492, %v1491, 0
    %v1494 = vshrl.u32 %v1493, 5
    %v1495 = vand.u32 %v1493, 31
    %v1496 = vsub.s32 32, %v1495
    %v1497 = vshrl.u32 683565275, %v1496
    %v1498 = vshll.u32 683565275, %v1495
    %v1499 = vshrl.u32 2475754826, %v1496
    %v1500 = vor.u32 %v1498, %v1499
    %v1501 = vshll.u32 2475754826, %v1495
    %v1502 = vshrl.u32 2131351028, %v1496
    %v1503 = vor.u32 %v1501, %v1502
    %v1504 = vshll.u32 2131351028, %v1495
    %v1505 = vshrl.u32 2102212464, %v1496
    %v1506 = vor.u32 %v1504, %v1505
    %v1507 = vshll.u32 2102212464, %v1495
    %v1508 = vshrl.u32 920167782, %v1496
    %v1509 = vor.u32 %v1507, %v1508
    %v1510 = vshll.u32 920167782, %v1495
    %v1511 = vshrl.u32 1326507024, %v1496
    %v1512 = vor.u32 %v1510, %v1511
    %vm1513 = vcmp.lt.s32.totalorder %v1494, 1
    %vm1514 = vcmp.lt.s32.totalorder %v1494, 2
    %vm1515 = vcmp.lt.s32.totalorder %v1494, 3
    %vm1516 = vcmp.lt.s32.totalorder %v1494, 4
    %v1517 = vsel %vm1513, %v1497, %v1500
    %v1518 = vsel %vm1516, %v1506, 2102212464
    %v1519 = vsel %vm1515, %v1503, %v1518
    %v1520 = vsel %vm1514, %v1517, %v1519
    %v1521 = vsel %vm1513, %v1500, %v1503
    %v1522 = vsel %vm1516, %v1509, 920167782
    %v1523 = vsel %vm1515, %v1506, %v1522
    %v1524 = vsel %vm1514, %v1521, %v1523
    %v1525 = vsel %vm1513, %v1503, %v1506
    %v1526 = vsel %vm1516, %v1512, 1326507024
    %v1527 = vsel %vm1515, %v1509, %v1526
    %v1528 = vsel %vm1514, %v1525, %v1527
    %v1529 = vshll.u32 %v1489, 8
    %v1530 = vmul.u32.u64.compose %v1529, %v1528
    %v1531 = vextract.low.u32 %v1530
    %v1532 = vextract.high.u32 %v1530
    %v1533 = vmul.u32.u64.compose %v1529, %v1524
    %v1534 = vextract.low.u32 %v1533
    %v1535 = vextract.high.u32 %v1533
    %v1536 = vmul.u32 %v1529, %v1520
    %v1537 = vadd.s32 %v1532, %v1534
    %vm1538 = vc.u32 %v1532, %v1534
    %v1539 = vadd.s32 %v1535, 1
    %v1540 = vsel %vm1538, %v1539, %v1535
    %v1541 = vadd.s32 %v1536, %v1540
    %v1542 = vadd.s32 %v1541, 536870912
    %v1543 = vshrl.u32 %v1542, 30
    %v1544 = vshll.u32 %v1543, 30
    %v1545 = vsub.s32 %v1541, %v1544
    %vm1546 = vcmp.lt.s32.totalorder %v1545, 0
    %v1547 = vsub.s32 0, %v1545
    %v1548 = vsel %vm1546, %v1547, %v1545
    %v1549 = vclz %v1548
    %v1550 = vsub.s32 %v1549, 2
    %vm1551 = vcmp.gt.s32.totalorder 0, %v1550
    %v1552 = vsel %vm1551, 0, %v1550
    %v1553 = vsub.s32 32, %v1552
    %v1554 = vshll.u32 %v1545, %v1552
    %v1555 = vshrl.u32 %v1537, %v1553
    %v1556 = vor.u32 %v1554, %v1555
    %v1557 = vsub.s32 4294967266, %v1552
    %v1558 = vadd.s32 %v1557, 127
    %v1559 = vshll.u32 %v1558, 23
    %v1560 = vor.u32 4788187, %v1559
    %v1561 = vand.u32 2147483647, %v1560
    %v1563 = vcvt.s32.f32 %v1556
    %v1564 = vmul.f32 %v1563, %v1561
    %v1565 = vxor.u32 %v1564, 2147483648
    %v1566 = vsel %vm1483, %v1565, %v1564
    %v1567 = vsub.s32 4, %v1543
    %v1568 = vsel %vm1483, %v1567, %v1543
    %v1569 = vsel %vm1482, %v241, %v1566
    %v1570 = vsel %vm1482, 0, %v1568
    %v1571 = vcosq.f32.pop %v1569
    %v1572 = vsinq.f32.pop %v1569
    %vm1573 = vweird.f32 %v241
    %v1574 = vand.u32 %v1570, 3
    %vm1575 = vcmp.lt.s32.totalorder %v1574, 2
    %vm1576 = vcmp.eq.s32.totalorder %v1574, 0
    %v1577 = vxor.u32 %v1572, 2147483648
    %v1578 = vsel %vm1576, %v1571, %v1577
    %vm1579 = vcmp.eq.s32.totalorder %v1574, 2
    %v1580 = vxor.u32 %v1571, 2147483648
    %v1581 = vsel %vm1579, %v1580, %v1572
    %v1582 = vsel %vm1575, %v1578, %v1581
    %v1583 = vsel %vm1573, nan, %v1582
    %v1584 = vand.u32 2147483647, %v242
    %vm1585 = vcmp.le.f32.partialorder %v1584, 0.7853982
    %vm1586 = vcmp.lt.s32.totalorder %v242, 0
    %v1587 = vand.u32 %v242, 2139095040
    %v1588 = vshrl.u32 %v1587, 23
    %v1589 = vsub.s32 %v1588, 127
    %v1590 = vand.u32 2147483647, %v242
    %v1591 = vand.u32 %v1590, 8388607
    %v1592 = vor.u32 %v1591, 8388608
    %v1593 = vsub.s32 0, %v1592
    %v1594 = vadd.s32 %v1589, 1
    %vm1595 = vcmp.gt.s32.totalorder %v1594, 0
    %v1596 = vsel %vm1595, %v1594, 0
    %v1597 = vshrl.u32 %v1596, 5
    %v1598 = vand.u32 %v1596, 31
    %v1599 = vsub.s32 32, %v1598
    %v1600 = vshrl.u32 683565275, %v1599
    %v1601 = vshll.u32 683565275, %v1598
    %v1602 = vshrl.u32 2475754826, %v1599
    %v1603 = vor.u32 %v1601, %v1602
    %v1604 = vshll.u32 2475754826, %v1598
    %v1605 = vshrl.u32 2131351028, %v1599
    %v1606 = vor.u32 %v1604, %v1605
    %v1607 = vshll.u32 2131351028, %v1598
    %v1608 = vshrl.u32 2102212464, %v1599
    %v1609 = vor.u32 %v1607, %v1608
    %v1610 = vshll.u32 2102212464, %v1598
    %v1611 = vshrl.u32 920167782, %v1599
    %v1612 = vor.u32 %v1610, %v1611
    %v1613 = vshll.u32 920167782, %v1598
    %v1614 = vshrl.u32 1326507024, %v1599
    %v1615 = vor.u32 %v1613, %v1614
    %vm1616 = vcmp.lt.s32.totalorder %v1597, 1
    %vm1617 = vcmp.lt.s32.totalorder %v1597, 2
    %vm1618 = vcmp.lt.s32.totalorder %v1597, 3
    %vm1619 = vcmp.lt.s32.totalorder %v1597, 4
    %v1620 = vsel %vm1616, %v1600, %v1603
    %v1621 = vsel %vm1619, %v1609, 2102212464
    %v1622 = vsel %vm1618, %v1606, %v1621
    %v1623 = vsel %vm1617, %v1620, %v1622
    %v1624 = vsel %vm1616, %v1603, %v1606
    %v1625 = vsel %vm1619, %v1612, 920167782
    %v1626 = vsel %vm1618, %v1609, %v1625
    %v1627 = vsel %vm1617, %v1624, %v1626
    %v1628 = vsel %vm1616, %v1606, %v1609
    %v1629 = vsel %vm1619, %v1615, 1326507024
    %v1630 = vsel %vm1618, %v1612, %v1629
    %v1631 = vsel %vm1617, %v1628, %v1630
    %v1632 = vshll.u32 %v1592, 8
    %v1633 = vmul.u32.u64.compose %v1632, %v1631
    %v1634 = vextract.low.u32 %v1633
    %v1635 = vextract.high.u32 %v1633
    %v1636 = vmul.u32.u64.compose %v1632, %v1627
    %v1637 = vextract.low.u32 %v1636
    %v1638 = vextract.high.u32 %v1636
    %v1639 = vmul.u32 %v1632, %v1623
    %v1640 = vadd.s32 %v1635, %v1637
    %vm1641 = vc.u32 %v1635, %v1637
    %v1642 = vadd.s32 %v1638, 1
    %v1643 = vsel %vm1641, %v1642, %v1638
    %v1644 = vadd.s32 %v1639, %v1643
    %v1645 = vadd.s32 %v1644, 536870912
    %v1646 = vshrl.u32 %v1645, 30
    %v1647 = vshll.u32 %v1646, 30
    %v1648 = vsub.s32 %v1644, %v1647
    %vm1649 = vcmp.lt.s32.totalorder %v1648, 0
    %v1650 = vsub.s32 0, %v1648
    %v1651 = vsel %vm1649, %v1650, %v1648
    %v1652 = vclz %v1651
    %v1653 = vsub.s32 %v1652, 2
    %vm1654 = vcmp.gt.s32.totalorder 0, %v1653
    %v1655 = vsel %vm1654, 0, %v1653
    %v1656 = vsub.s32 32, %v1655
    %v1657 = vshll.u32 %v1648, %v1655
    %v1658 = vshrl.u32 %v1640, %v1656
    %v1659 = vor.u32 %v1657, %v1658
    %v1660 = vsub.s32 4294967266, %v1655
    %v1661 = vadd.s32 %v1660, 127
    %v1662 = vshll.u32 %v1661, 23
    %v1663 = vor.u32 4788187, %v1662
    %v1664 = vand.u32 2147483647, %v1663
    %v1666 = vcvt.s32.f32 %v1659
    %v1667 = vmul.f32 %v1666, %v1664
    %v1668 = vxor.u32 %v1667, 2147483648
    %v1669 = vsel %vm1586, %v1668, %v1667
    %v1670 = vsub.s32 4, %v1646
    %v1671 = vsel %vm1586, %v1670, %v1646
    %v1672 = vsel %vm1585, %v242, %v1669
    %v1673 = vsel %vm1585, 0, %v1671
    %v1674 = vcosq.f32.pop %v1672
    %v1675 = vsinq.f32.pop %v1672
    %vm1676 = vweird.f32 %v242
    %v1677 = vand.u32 %v1673, 3
    %vm1678 = vcmp.lt.s32.totalorder %v1677, 2
    %vm1679 = vcmp.eq.s32.totalorder %v1677, 0
    %v1680 = vxor.u32 %v1675, 2147483648
    %v1681 = vsel %vm1679, %v1674, %v1680
    %vm1682 = vcmp.eq.s32.totalorder %v1677, 2
    %v1683 = vxor.u32 %v1674, 2147483648
    %v1684 = vsel %vm1682, %v1683, %v1675
    %v1685 = vsel %vm1678, %v1681, %v1684
    %v1686 = vsel %vm1676, nan, %v1685
    %v1687 = vand.u32 2147483647, %v243
    %vm1688 = vcmp.le.f32.partialorder %v1687, 0.7853982
    %vm1689 = vcmp.lt.s32.totalorder %v243, 0
    %v1690 = vand.u32 %v243, 2139095040
    %v1691 = vshrl.u32 %v1690, 23
    %v1692 = vsub.s32 %v1691, 127
    %v1693 = vand.u32 2147483647, %v243
    %v1694 = vand.u32 %v1693, 8388607
    %v1695 = vor.u32 %v1694, 8388608
    %v1696 = vsub.s32 0, %v1695
    %v1697 = vadd.s32 %v1692, 1
    %vm1698 = vcmp.gt.s32.totalorder %v1697, 0
    %v1699 = vsel %vm1698, %v1697, 0
    %v1700 = vshrl.u32 %v1699, 5
    %v1701 = vand.u32 %v1699, 31
    %v1702 = vsub.s32 32, %v1701
    %v1703 = vshrl.u32 683565275, %v1702
    %v1704 = vshll.u32 683565275, %v1701
    %v1705 = vshrl.u32 2475754826, %v1702
    %v1706 = vor.u32 %v1704, %v1705
    %v1707 = vshll.u32 2475754826, %v1701
    %v1708 = vshrl.u32 2131351028, %v1702
    %v1709 = vor.u32 %v1707, %v1708
    %v1710 = vshll.u32 2131351028, %v1701
    %v1711 = vshrl.u32 2102212464, %v1702
    %v1712 = vor.u32 %v1710, %v1711
    %v1713 = vshll.u32 2102212464, %v1701
    %v1714 = vshrl.u32 920167782, %v1702
    %v1715 = vor.u32 %v1713, %v1714
    %v1716 = vshll.u32 920167782, %v1701
    %v1717 = vshrl.u32 1326507024, %v1702
    %v1718 = vor.u32 %v1716, %v1717
    %vm1719 = vcmp.lt.s32.totalorder %v1700, 1
    %vm1720 = vcmp.lt.s32.totalorder %v1700, 2
    %vm1721 = vcmp.lt.s32.totalorder %v1700, 3
    %vm1722 = vcmp.lt.s32.totalorder %v1700, 4
    %v1723 = vsel %vm1719, %v1703, %v1706
    %v1724 = vsel %vm1722, %v1712, 2102212464
    %v1725 = vsel %vm1721, %v1709, %v1724
    %v1726 = vsel %vm1720, %v1723, %v1725
    %v1727 = vsel %vm1719, %v1706, %v1709
    %v1728 = vsel %vm1722, %v1715, 920167782
    %v1729 = vsel %vm1721, %v1712, %v1728
    %v1730 = vsel %vm1720, %v1727, %v1729
    %v1731 = vsel %vm1719, %v1709, %v1712
    %v1732 = vsel %vm1722, %v1718, 1326507024
    %v1733 = vsel %vm1721, %v1715, %v1732
    %v1734 = vsel %vm1720, %v1731, %v1733
    %v1735 = vshll.u32 %v1695, 8
    %v1736 = vmul.u32.u64.compose %v1735, %v1734
    %v1737 = vextract.low.u32 %v1736
    %v1738 = vextract.high.u32 %v1736
    %v1739 = vmul.u32.u64.compose %v1735, %v1730
    %v1740 = vextract.low.u32 %v1739
    %v1741 = vextract.high.u32 %v1739
    %v1742 = vmul.u32 %v1735, %v1726
    %v1743 = vadd.s32 %v1738, %v1740
    %vm1744 = vc.u32 %v1738, %v1740
    %v1745 = vadd.s32 %v1741, 1
    %v1746 = vsel %vm1744, %v1745, %v1741
    %v1747 = vadd.s32 %v1742, %v1746
    %v1748 = vadd.s32 %v1747, 536870912
    %v1749 = vshrl.u32 %v1748, 30
    %v1750 = vshll.u32 %v1749, 30
    %v1751 = vsub.s32 %v1747, %v1750
    %vm1752 = vcmp.lt.s32.totalorder %v1751, 0
    %v1753 = vsub.s32 0, %v1751
    %v1754 = vsel %vm1752, %v1753, %v1751
    %v1755 = vclz %v1754
    %v1756 = vsub.s32 %v1755, 2
    %vm1757 = vcmp.gt.s32.totalorder 0, %v1756
    %v1758 = vsel %vm1757, 0, %v1756
    %v1759 = vsub.s32 32, %v1758
    %v1760 = vshll.u32 %v1751, %v1758
    %v1761 = vshrl.u32 %v1743, %v1759
    %v1762 = vor.u32 %v1760, %v1761
    %v1763 = vsub.s32 4294967266, %v1758
    %v1764 = vadd.s32 %v1763, 127
    %v1765 = vshll.u32 %v1764, 23
    %v1766 = vor.u32 4788187, %v1765
    %v1767 = vand.u32 2147483647, %v1766
    %v1769 = vcvt.s32.f32 %v1762
    %v1770 = vmul.f32 %v1769, %v1767
    %v1771 = vxor.u32 %v1770, 2147483648
    %v1772 = vsel %vm1689, %v1771, %v1770
    %v1773 = vsub.s32 4, %v1749
    %v1774 = vsel %vm1689, %v1773, %v1749
    %v1775 = vsel %vm1688, %v243, %v1772
    %v1776 = vsel %vm1688, 0, %v1774
    %v1777 = vcosq.f32.pop %v1775
    %v1778 = vsinq.f32.pop %v1775
    %vm1779 = vweird.f32 %v243
    %v1780 = vand.u32 %v1776, 3
    %vm1781 = vcmp.lt.s32.totalorder %v1780, 2
    %vm1782 = vcmp.eq.s32.totalorder %v1780, 0
    %v1783 = vxor.u32 %v1778, 2147483648
    %v1784 = vsel %vm1782, %v1777, %v1783
    %vm1785 = vcmp.eq.s32.totalorder %v1780, 2
    %v1786 = vxor.u32 %v1777, 2147483648
    %v1787 = vsel %vm1785, %v1786, %v1778
    %v1788 = vsel %vm1781, %v1784, %v1787
    %v1789 = vsel %vm1779, nan, %v1788
    %v1790 = vand.u32 2147483647, %v244
    %vm1791 = vcmp.le.f32.partialorder %v1790, 0.7853982
    %vm1792 = vcmp.lt.s32.totalorder %v244, 0
    %v1793 = vand.u32 %v244, 2139095040
    %v1794 = vshrl.u32 %v1793, 23
    %v1795 = vsub.s32 %v1794, 127
    %v1796 = vand.u32 2147483647, %v244
    %v1797 = vand.u32 %v1796, 8388607
    %v1798 = vor.u32 %v1797, 8388608
    %v1799 = vsub.s32 0, %v1798
    %v1800 = vadd.s32 %v1795, 1
    %vm1801 = vcmp.gt.s32.totalorder %v1800, 0
    %v1802 = vsel %vm1801, %v1800, 0
    %v1803 = vshrl.u32 %v1802, 5
    %v1804 = vand.u32 %v1802, 31
    %v1805 = vsub.s32 32, %v1804
    %v1806 = vshrl.u32 683565275, %v1805
    %v1807 = vshll.u32 683565275, %v1804
    %v1808 = vshrl.u32 2475754826, %v1805
    %v1809 = vor.u32 %v1807, %v1808
    %v1810 = vshll.u32 2475754826, %v1804
    %v1811 = vshrl.u32 2131351028, %v1805
    %v1812 = vor.u32 %v1810, %v1811
    %v1813 = vshll.u32 2131351028, %v1804
    %v1814 = vshrl.u32 2102212464, %v1805
    %v1815 = vor.u32 %v1813, %v1814
    %v1816 = vshll.u32 2102212464, %v1804
    %v1817 = vshrl.u32 920167782, %v1805
    %v1818 = vor.u32 %v1816, %v1817
    %v1819 = vshll.u32 920167782, %v1804
    %v1820 = vshrl.u32 1326507024, %v1805
    %v1821 = vor.u32 %v1819, %v1820
    %vm1822 = vcmp.lt.s32.totalorder %v1803, 1
    %vm1823 = vcmp.lt.s32.totalorder %v1803, 2
    %vm1824 = vcmp.lt.s32.totalorder %v1803, 3
    %vm1825 = vcmp.lt.s32.totalorder %v1803, 4
    %v1826 = vsel %vm1822, %v1806, %v1809
    %v1827 = vsel %vm1825, %v1815, 2102212464
    %v1828 = vsel %vm1824, %v1812, %v1827
    %v1829 = vsel %vm1823, %v1826, %v1828
    %v1830 = vsel %vm1822, %v1809, %v1812
    %v1831 = vsel %vm1825, %v1818, 920167782
    %v1832 = vsel %vm1824, %v1815, %v1831
    %v1833 = vsel %vm1823, %v1830, %v1832
    %v1834 = vsel %vm1822, %v1812, %v1815
    %v1835 = vsel %vm1825, %v1821, 1326507024
    %v1836 = vsel %vm1824, %v1818, %v1835
    %v1837 = vsel %vm1823, %v1834, %v1836
    %v1838 = vshll.u32 %v1798, 8
    %v1839 = vmul.u32.u64.compose %v1838, %v1837
    %v1840 = vextract.low.u32 %v1839
    %v1841 = vextract.high.u32 %v1839
    %v1842 = vmul.u32.u64.compose %v1838, %v1833
    %v1843 = vextract.low.u32 %v1842
    %v1844 = vextract.high.u32 %v1842
    %v1845 = vmul.u32 %v1838, %v1829
    %v1846 = vadd.s32 %v1841, %v1843
    %vm1847 = vc.u32 %v1841, %v1843
    %v1848 = vadd.s32 %v1844, 1
    %v1849 = vsel %vm1847, %v1848, %v1844
    %v1850 = vadd.s32 %v1845, %v1849
    %v1851 = vadd.s32 %v1850, 536870912
    %v1852 = vshrl.u32 %v1851, 30
    %v1853 = vshll.u32 %v1852, 30
    %v1854 = vsub.s32 %v1850, %v1853
    %vm1855 = vcmp.lt.s32.totalorder %v1854, 0
    %v1856 = vsub.s32 0, %v1854
    %v1857 = vsel %vm1855, %v1856, %v1854
    %v1858 = vclz %v1857
    %v1859 = vsub.s32 %v1858, 2
    %vm1860 = vcmp.gt.s32.totalorder 0, %v1859
    %v1861 = vsel %vm1860, 0, %v1859
    %v1862 = vsub.s32 32, %v1861
    %v1863 = vshll.u32 %v1854, %v1861
    %v1864 = vshrl.u32 %v1846, %v1862
    %v1865 = vor.u32 %v1863, %v1864
    %v1866 = vsub.s32 4294967266, %v1861
    %v1867 = vadd.s32 %v1866, 127
    %v1868 = vshll.u32 %v1867, 23
    %v1869 = vor.u32 4788187, %v1868
    %v1870 = vand.u32 2147483647, %v1869
    %v1872 = vcvt.s32.f32 %v1865
    %v1873 = vmul.f32 %v1872, %v1870
    %v1874 = vxor.u32 %v1873, 2147483648
    %v1875 = vsel %vm1792, %v1874, %v1873
    %v1876 = vsub.s32 4, %v1852
    %v1877 = vsel %vm1792, %v1876, %v1852
    %v1878 = vsel %vm1791, %v244, %v1875
    %v1879 = vsel %vm1791, 0, %v1877
    %v1880 = vcosq.f32.pop %v1878
    %v1881 = vsinq.f32.pop %v1878
    %vm1882 = vweird.f32 %v244
    %v1883 = vand.u32 %v1879, 3
    %vm1884 = vcmp.lt.s32.totalorder %v1883, 2
    %vm1885 = vcmp.eq.s32.totalorder %v1883, 0
    %v1886 = vxor.u32 %v1881, 2147483648
    %v1887 = vsel %vm1885, %v1880, %v1886
    %vm1888 = vcmp.eq.s32.totalorder %v1883, 2
    %v1889 = vxor.u32 %v1880, 2147483648
    %v1890 = vsel %vm1888, %v1889, %v1881
    %v1891 = vsel %vm1884, %v1887, %v1890
    %v1892 = vsel %vm1882, nan, %v1891
    %v1893 = vpack.c.bf16 %v450, %v347
    %v1894 = vpack.c.bf16 %v656, %v553
    %v1895 = vpack.c.bf16 %v862, %v759
    %v1896 = vpack.c.bf16 %v1068, %v965
    %v1897 = vpack.c.bf16 %v1274, %v1171
    %v1898 = vpack.c.bf16 %v1480, %v1377
    %v1899 = vpack.c.bf16 %v1686, %v1583
    %v1900 = vpack.c.bf16 %v1892, %v1789
    %v1901 = vld [vmem:[%s2] sm:$0xf]
    %v1902 = vld [vmem:[%s2 + $0x4] sm:$0xf]
    %v1903 = vld [vmem:[%s2 + $0x8] sm:$0xf]
    %v1904 = vld [vmem:[%s2 + $0xc] sm:$0xf]
    %v1905 = vld [vmem:[%s3] sm:$0x1]
    %v1907 = vlaneseq
    %v1908 = vshrl.u32 %v1907, 7
    %v1909 = vsub.s32 0, %v1908
    %v1910 = vrot.slane %v1905, %v1909
    %v1916 = vunpack.c.l.b16 %v1901
    %v1917 = vunpack.c.l.b16 %v1902
    %v1918 = vunpack.c.l.b16 %v1903
    %v1919 = vunpack.c.l.b16 %v1904
    %v1920 = vpack.c.b16 %v1917, %v1916
    %v1921 = vpack.c.b16 %v1919, %v1918
    %vm1924 = vcmask 261120
    %v1926 = vsel %vm1924, %v1893, 0
    %v1929 = vsel %vm1924, %v1894, 0
    %v1932 = vsel %vm1924, %v1895, 0
    %v1935 = vsel %vm1924, %v1896, 0
    %v1938 = vsel %vm1924, %v1897, 0
    %v1941 = vsel %vm1924, %v1898, 0
    %v1944 = vsel %vm1924, %v1899, 0
    %v1947 = vsel %vm1924, %v1900, 0
    %1949 = vmatprep.subr.bf16.mxu0 0
    %1950 = vmatpush1.bf16.msra.mxu0 %v1920
    %1951 = vmatprep.subr.bf16.mxu0 0
    %1952 = vmatpush1.bf16.msra.mxu0 %v1921
    %1953 = vmatprep.subr.bf16.mxu0 0
    %1954 = vmatpush1.bf16.msra.mxu0 0
    %1955 = vmatprep.subr.bf16.mxu0 0
    %1956 = vmatpush1.bf16.msra.mxu0 0
    %1957 = vmatprep.subr.bf16.mxu0 0
    %1958 = vmatpush1.bf16.msra.mxu0 0
    %1959 = vmatprep.subr.bf16.mxu0 0
    %1960 = vmatpush1.bf16.msra.mxu0 0
    %1961 = vmatprep.subr.bf16.mxu0 0
    %1962 = vmatpush1.bf16.msra.mxu0 0
    %1963 = vmatprep.subr.bf16.mxu0 0
    %1964 = vmatpush1.bf16.msra.mxu0 0
    %1965 = vmatprep.subr.bf16.mxu0 0
    %1966 = vmatpush1.bf16.msra.mxu0 0
    %1967 = vmatprep.subr.bf16.mxu0 0
    %1968 = vmatpush1.bf16.msra.mxu0 0
    %1969 = vmatprep.subr.bf16.mxu0 0
    %1970 = vmatpush1.bf16.msra.mxu0 0
    %1971 = vmatprep.subr.bf16.mxu0 0
    %1972 = vmatpush1.bf16.msra.mxu0 0
    %1973 = vmatprep.subr.bf16.mxu0 0
    %1974 = vmatpush1.bf16.msra.mxu0 0
    %1975 = vmatprep.subr.bf16.mxu0 0
    %1976 = vmatpush1.bf16.msra.mxu0 0
    %1977 = vmatprep.subr.bf16.mxu0 0
    %1978 = vmatpush1.bf16.msra.mxu0 0
    %1979 = vmatprep.subr.bf16.mxu0 0
    %1980 = vmatpush1.bf16.msra.mxu0 0
    %1981 = vmatprep.mubr.bf16.mxu0 0
    %1982 = vmatmul.mubr.bf16.gmra.mrb[0].mxu0 %v1926
    %v1983 = vpop.f32.mrb[0].mxu0
    %v1984 = vadd.f32 %v1910, %v1983
    %v1985 = vpop.f32.mrb[0].mxu0
    %v1986 = vpop.f32.mrb[0].mxu0
    %v1987 = vadd.f32 %v1910, %v1986
    %v1988 = vpop.f32.mrb[0].mxu0
    %1989 = vmatprep.mubr.bf16.mxu0 0
    %1990 = vmatmul.mubr.bf16.gmra.mrb[0].mxu0 %v1929
    %v1991 = vpop.f32.mrb[0].mxu0
    %v1992 = vadd.f32 %v1910, %v1991
    %v1993 = vpop.f32.mrb[0].mxu0
    %v1994 = vpop.f32.mrb[0].mxu0
    %v1995 = vadd.f32 %v1910, %v1994
    %v1996 = vpop.f32.mrb[0].mxu0
    %1997 = vmatprep.mubr.bf16.mxu0 0
    %1998 = vmatmul.mubr.bf16.gmra.mrb[0].mxu0 %v1932
    %v1999 = vpop.f32.mrb[0].mxu0
    %v2000 = vadd.f32 %v1910, %v1999
    %v2001 = vpop.f32.mrb[0].mxu0
    %v2002 = vpop.f32.mrb[0].mxu0
    %v2003 = vadd.f32 %v1910, %v2002
    %v2004 = vpop.f32.mrb[0].mxu0
    %2005 = vmatprep.mubr.bf16.mxu0 0
    %2006 = vmatmul.mubr.bf16.gmra.mrb[0].mxu0 %v1935
    %v2007 = vpop.f32.mrb[0].mxu0
    %v2008 = vadd.f32 %v1910, %v2007
    %v2009 = vpop.f32.mrb[0].mxu0
    %v2010 = vpop.f32.mrb[0].mxu0
    %v2011 = vadd.f32 %v1910, %v2010
    %v2012 = vpop.f32.mrb[0].mxu0
    %2013 = vmatprep.mubr.bf16.mxu0 0
    %2014 = vmatmul.mubr.bf16.gmra.mrb[0].mxu0 %v1938
    %v2015 = vpop.f32.mrb[0].mxu0
    %v2016 = vadd.f32 %v1910, %v2015
    %v2017 = vpop.f32.mrb[0].mxu0
    %v2018 = vpop.f32.mrb[0].mxu0
    %v2019 = vadd.f32 %v1910, %v2018
    %v2020 = vpop.f32.mrb[0].mxu0
    %2021 = vmatprep.mubr.bf16.mxu0 0
    %2022 = vmatmul.mubr.bf16.gmra.mrb[0].mxu0 %v1941
    %v2023 = vpop.f32.mrb[0].mxu0
    %v2024 = vadd.f32 %v1910, %v2023
    %v2025 = vpop.f32.mrb[0].mxu0
    %v2026 = vpop.f32.mrb[0].mxu0
    %v2027 = vadd.f32 %v1910, %v2026
    %v2028 = vpop.f32.mrb[0].mxu0
    %2029 = vmatprep.mubr.bf16.mxu0 0
    %2030 = vmatmul.mubr.bf16.gmra.mrb[0].mxu0 %v1944
    %v2031 = vpop.f32.mrb[0].mxu0
    %v2032 = vadd.f32 %v1910, %v2031
    %v2033 = vpop.f32.mrb[0].mxu0
    %v2034 = vpop.f32.mrb[0].mxu0
    %v2035 = vadd.f32 %v1910, %v2034
    %v2036 = vpop.f32.mrb[0].mxu0
    %2037 = vmatprep.mubr.bf16.mxu0 0
    %2038 = vmatmul.mubr.bf16.gmra.mrb[0].mxu0 %v1947
    %v2039 = vpop.f32.mrb[0].mxu0
    %v2040 = vadd.f32 %v1910, %v2039
    %v2041 = vpop.f32.mrb[0].mxu0
    %v2042 = vpop.f32.mrb[0].mxu0
    %v2043 = vadd.f32 %v1910, %v2042
    %v2044 = vpop.f32.mrb[0].mxu0
    %2045 = vdwg.mxu0
    %2046 = vst [vmem:[#allocation2] sm:$0xff] %v1984
    %2047 = vst [vmem:[#allocation2 + $0x8] sm:$0xff] %v1987
    %2048 = vst [vmem:[#allocation2 + $0x10] sm:$0xff] %v1992
    %2049 = vst [vmem:[#allocation2 + $0x18] sm:$0xff] %v1995
    %2050 = vst [vmem:[#allocation2 + $0x20] sm:$0xff] %v2000
    %2051 = vst [vmem:[#allocation2 + $0x28] sm:$0xff] %v2003
    %2052 = vst [vmem:[#allocation2 + $0x30] sm:$0xff] %v2008
    %2053 = vst [vmem:[#allocation2 + $0x38] sm:$0xff] %v2011
    %2054 = vst [vmem:[#allocation2 + $0x40] sm:$0xff] %v2016
    %2055 = vst [vmem:[#allocation2 + $0x48] sm:$0xff] %v2019
    %2056 = vst [vmem:[#allocation2 + $0x50] sm:$0xff] %v2024
    %2057 = vst [vmem:[#allocation2 + $0x58] sm:$0xff] %v2027
    %2058 = vst [vmem:[#allocation2 + $0x60] sm:$0xff] %v2032
    %2059 = vst [vmem:[#allocation2 + $0x68] sm:$0xff] %v2035
    %2060 = vst [vmem:[#allocation2 + $0x70] sm:$0xff] %v2040
    %2061 = vst [vmem:[#allocation2 + $0x78] sm:$0xff] %v2043
    // Predicated region
    $region18: #{tpu_custom_call.1} parent=1 // pred_check
      _
    $region19: #{tpu_custom_call.1} parent=1 // pred_check_branch
      %2063 = sbr.rel (0) target = $region21
    $region20: #{tpu_custom_call.1} parent=1 // pred_region
      %s2065 = ssub.s32 2048, 2048
      %2066 = vsyncadd [#allocation3], %s2065
      %s2067 = sshll.u32 [#allocation2], 4
      %s2068 = int_to_ptr.vmem [resolvable:$true] %s2067
      %2073 = dma.vmem_to_hbm [thread:$0]  %s2068, 2048, %s4, [#allocation3], 128, 128, 8
    $region21: #{tpu_custom_call.1} parent=1 // pred_fallthru
      _
    // Predicated region
    $region22: #{tpu_custom_call.1} parent=1 // pred_check
      _
    $region23: #{tpu_custom_call.1} parent=1 // pred_check_branch
      %2075 = sbr.rel (0) target = $region25
    $region24: #{tpu_custom_call.1} parent=1 // pred_region
      %2076 = dma.done [#allocation3], 2048
    $region25: #{tpu_custom_call.1} parent=1 // pred_fallthru
      _
    %2077 = vsyncpa [#allocation3], 1

</llo_original>
